<compile_context>
chip_gen: v7x
topology: tpu7x:2x2x1
jax: 0.10.0
libtpu: 0.0.40
codegen_flags: <defaults>
</compile_context>

<pallas_src>
import functools

import numpy as np
import jax
import jax.numpy as jnp
from jax.experimental import pallas as pl
from jax.experimental.pallas import tpu as pltpu


def _round_up(n, m):
    return ((n + m - 1) // m) * m


def _pick_tile(dim_p, prefer_split=False):
    """dim_p is a multiple of 128; pick the largest tile in {512,256,128} that
    divides it.  prefer_split avoids a single N tile so megacore can shard j."""
    assert dim_p % 128 == 0
    for t in (512, 256, 128):
        if dim_p % t == 0 and not (prefer_split and t > 128 and dim_p // t < 2):
            return t
    return 128


# ----------------------------------------------------------------------------
# Kernel 1: fused dilated Conv1d (dilations 1,2,4) + ReLU + concat for the
# 6 single-channel "features".  Output last dim padded to 128 lanes so the
# HBM writeback is a single lane-dense block.
# ----------------------------------------------------------------------------
def conv_feature_kernel(x_ref, w1_ref, b1_ref, w2_ref, b2_ref, w3_ref, b3_ref,
                        o_ref, *, ksize):
    o_ref[...] = jnp.zeros_like(o_ref)            # zero the 128-padded tail
    x = x_ref[...]                                 # (B, C, L)
    B, C, L = x.shape
    F = w1_ref.shape[0]
    dil_params = [(1, w1_ref, b1_ref), (2, w2_ref, b2_ref), (4, w3_ref, b3_ref)]
    lens = [L - d * (ksize - 1) for d, _, _ in dil_params]
    per_feat = sum(lens)

    for c in range(C):                             # the 6 feature slices
        xc = x[:, c, :]                            # (B, L)
        off = c * per_feat
        for (d, w_ref, b_ref), Ld in zip(dil_params, lens):
            w = w_ref[...]                         # (F, ksize)
            b = b_ref[...]                         # (F, 1)
            acc = jnp.zeros((B, F, Ld), jnp.float32)
            for j in range(ksize):                 # k taps, dilation d
                acc = acc + xc[:, None, j * d: j * d + Ld] * w[None, :, j:j + 1]
            acc = acc + b[None, :, :]
            o_ref[:, :, off: off + Ld] = jnp.maximum(acc, 0.0)   # ReLU + concat
            off += Ld


def conv_features(x6, conv_params, ksize, D0p):
    B, C, L = x6.shape
    (w1, b1), (w2, b2), (w3, b3) = conv_params
    F = w1.shape[0]

    def full(shape):
        return pl.BlockSpec(shape, lambda i, _s=len(shape): (0,) * _s)

    return pl.pallas_call(
        functools.partial(conv_feature_kernel, ksize=ksize),
        out_shape=jax.ShapeDtypeStruct((B, F, D0p), jnp.float32),
        grid=(1,),
        in_specs=[full((B, C, L)),
                  full((F, ksize)), full((F, 1)),
                  full((F, ksize)), full((F, 1)),
                  full((F, ksize)), full((F, 1))],
        out_specs=full((B, F, D0p)),
    )(x6, w1, b1.reshape(F, 1), w2, b2.reshape(F, 1), w3, b3.reshape(F, 1))


# ----------------------------------------------------------------------------
# Kernel 2: dense layer  out = [relu](x @ W + b) with
#   * x resident in VMEM as (nk, Mp, tk) chunks (BlockSpec index is constant),
#   * bf16 weights streamed (tk, tn) across the K ("arbitrary") grid axis,
#   * f32 VMEM accumulator, bias+ReLU epilogue on the last K step,
#   * output emitted in the (nj, Mp, tn) chunked layout the next layer expects.
# ----------------------------------------------------------------------------
def dense_kernel(x_ref, w_ref, b_ref, o_ref, acc_ref, *, apply_relu):
    kk = pl.program_id(1)

    @pl.when(kk == 0)
    def _():
        acc_ref[...] = jnp.zeros_like(acc_ref)

    x_blk = x_ref[kk]                              # (Mp, tk), already in VMEM
    acc_ref[...] += jnp.dot(x_blk.astype(jnp.bfloat16), w_ref[...],
                            preferred_element_type=jnp.float32)

    @pl.when(kk == pl.num_programs(1) - 1)
    def _():
        r = acc_ref[...] + b_ref[...]
        if apply_relu:
            r = jnp.maximum(r, 0.0)
        o_ref[0] = r.astype(o_ref.dtype)


def dense_pallas(x_chunks, w, b, apply_relu):
    """x_chunks: (nk, Mp, tk) f32;  w: (Kp, Np) bf16, Kp == nk*tk;  b: (1, Np) f32.
    Returns the activation chunked as (Np//tn, Mp, tn) f32."""
    nk, Mp, tk = x_chunks.shape
    Kp, Np = w.shape
    assert Kp == nk * tk and b.shape == (1, Np)
    tn = _pick_tile(Np, prefer_split=True)
    nj = Np // tn

    return pl.pallas_call(
        functools.partial(dense_kernel, apply_relu=apply_relu),
        out_shape=jax.ShapeDtypeStruct((nj, Mp, tn), jnp.float32),
        grid_spec=pltpu.PrefetchScalarGridSpec(
            num_scalar_prefetch=0,
            grid=(nj, nk),
            in_specs=[
                pl.BlockSpec((nk, Mp, tk), lambda j, kk: (0, 0, 0)),  # resident x
                pl.BlockSpec((tk, tn), lambda j, kk: (kk, j)),        # streamed W
                pl.BlockSpec((1, tn), lambda j, kk: (0, j)),          # bias
            ],
            out_specs=pl.BlockSpec((1, Mp, tn), lambda j, kk: (j, 0, 0)),
            scratch_shapes=[pltpu.VMEM((Mp, tn), jnp.float32)]),
        compiler_params=pltpu.CompilerParams(
            dimension_semantics=("parallel", "arbitrary")),
    )(x_chunks, w, b)


# ----------------------------------------------------------------------------
# Kernel 3: fused tail = output_layer (->P) + permute(0,2,1) + output_layerf.
# output_layerf(16->1) is a per-batch weighted sum over the F filter rows,
# implemented as a small (Bp, Mp) selection-matrix matmul.
# ----------------------------------------------------------------------------
def tail_kernel(h_ref, wo_ref, bo_ref, wsel_ref, bf_ref, o_ref):
    nk, Mp, tk = h_ref.shape
    Pp = wo_ref.shape[1]
    acc = jnp.zeros((Mp, Pp), jnp.float32)
    for kk in range(nk):                           # static; nk == 1 here
        acc = acc + jnp.dot(h_ref[kk].astype(jnp.bfloat16),
                            wo_ref[kk * tk:(kk + 1) * tk, :],
                            preferred_element_type=jnp.float32)
    t = acc + bo_ref[...]                          # output_layer result (Mp, Pp)
    o = jnp.dot(wsel_ref[...], t, preferred_element_type=jnp.float32)
    o_ref[...] = (o + bf_ref[...]).astype(o_ref.dtype)


def tail_pallas(h_chunks, wo, bo, wsel, bfv):
    nk, Mp, tk = h_chunks.shape
    Kp, Pp = wo.shape
    Bp = wsel.shape[0]
    assert Kp == nk * tk and wsel.shape[1] == Mp

    def full(shape):
        return pl.BlockSpec(shape, lambda i, _s=len(shape): (0,) * _s)

    return pl.pallas_call(
        tail_kernel,
        out_shape=jax.ShapeDtypeStruct((Bp, Pp), jnp.float32),
        grid=(1,),
        in_specs=[full((nk, Mp, tk)), full((Kp, Pp)), full((1, Pp)),
                  full((Bp, Mp)), full((1, 1))],
        out_specs=full((Bp, Pp)),
    )(h_chunks, wo, bo, wsel, bfv)


# ----------------------------------------------------------------------------
# One-time parameter preparation: transpose, zero-pad to 128-multiples, bf16.
# ----------------------------------------------------------------------------
def prepare_params(params, B, F):
    prep = {"conv": params["conv"]}
    for name in ("dense1", "dense2", "dense3", "dense4", "output_layer"):
        W, bias = params[name]                     # W: (out, in), bias: (out,)
        N, K = W.shape
        Kp, Np = _round_up(K, 128), _round_up(N, 128)
        wp = jnp.zeros((Kp, Np), jnp.bfloat16).at[:K, :N].set(
            W.T.astype(jnp.bfloat16))
        bp = jnp.zeros((1, Np), jnp.float32).at[0, :N].set(bias)
        prep[name] = (wp, bp)

    Wf, bf = params["output_layerf"]               # (1, F), (1,)
    M = B * F
    Mp, Bp = _round_up(M, 8), _round_up(B, 8)
    wsel = jnp.zeros((Bp, Mp), jnp.float32)
    wsel = wsel.at[:B, :M].set(
        jnp.kron(jnp.eye(B, dtype=jnp.float32), Wf.reshape(1, F)))
    prep["wsel"] = wsel
    prep["bf"] = bf.reshape(1, 1).astype(jnp.float32)
    return prep


# ----------------------------------------------------------------------------
# Full forward pass (mirrors Model_arch.forward; _x, y, _y are unused there).
# ----------------------------------------------------------------------------
def forward(inputs, prep, ksize, F, P):
    B = inputs.shape[0]
    x6 = inputs[:, :6, :]                                  # the 6 feature slices
    L = x6.shape[2]
    D0 = 6 * sum(L - d * (ksize - 1) for d in (1, 2, 4))
    D0p = _round_up(D0, 128)

    feat = conv_features(x6, prep["conv"], ksize, D0p)     # (B, F, D0p)

    M = B * F
    Mp = _round_up(M, 8)
    h = feat.reshape(M, D0p)
    if Mp != M:
        h = jnp.pad(h, ((0, Mp - M), (0, 0)))
    tk0 = _pick_tile(D0p)
    h = h.reshape(Mp, D0p // tk0, tk0).transpose(1, 0, 2)  # (nk, Mp, tk)

    for name in ("dense1", "dense2", "dense3", "dense4"):
        wp, bp = prep[name]
        h = dense_pallas(h, wp, bp, apply_relu=True)       # (nj, Mp, tn) chunks

    wo, bo = prep["output_layer"]
    out = tail_pallas(h, wo, bo, prep["wsel"], prep["bf"]) # (Bp, Pp)
    return out[:B, :P].reshape(B, P, 1)


# ----------------------------------------------------------------------------
# Pure-JAX reference with the same precision policy (bf16 dense weights /
# activations, f32 accumulation; conv + output_layerf in f32).
# ----------------------------------------------------------------------------
def reference(inputs, params, ksize):
    x6 = inputs[:, :6, :]
    B, C, L = x6.shape
    convs = []
    for c in range(6):
        xc = x6[:, c, :]
        for (w, b), d in zip(params["conv"], (1, 2, 4)):
            Ld = L - d * (ksize - 1)
            o = b[None, :, None] + sum(
                xc[:, None, j * d: j * d + Ld] * w[None, :, j:j + 1]
                for j in range(ksize))
            convs.append(jax.nn.relu(o))
    h = jnp.concatenate(convs, axis=2)                     # (B, F, D0)
    for name in ("dense1", "dense2", "dense3", "dense4"):
        W, b = params[name]
        h = jax.nn.relu(jnp.dot(h.astype(jnp.bfloat16),
                                W.T.astype(jnp.bfloat16),
                                preferred_element_type=jnp.float32) + b)
    Wo, bo = params["output_layer"]
    out = jnp.dot(h.astype(jnp.bfloat16), Wo.T.astype(jnp.bfloat16),
                  preferred_element_type=jnp.float32) + bo
    out = out.transpose(0, 2, 1)                           # permute(0, 2, 1)
    Wf, bf = params["output_layerf"]
    return out @ Wf.T + bf


# ----------------------------------------------------------------------------
# Deterministic parameter init (PyTorch-style uniform(-1/sqrt(fan_in), +)).
# ----------------------------------------------------------------------------
def init_params(key, ksize, F, L, P, hidden):
    D0 = 6 * sum(L - d * (ksize - 1) for d in (1, 2, 4))
    H1, H2, H3, H4 = hidden
    ks = jax.random.split(key, 9)

    def lin(k, fi, fo):
        kw, kb = jax.random.split(k)
        bnd = 1.0 / np.sqrt(fi)
        return (jax.random.uniform(kw, (fo, fi), jnp.float32, -bnd, bnd),
                jax.random.uniform(kb, (fo,), jnp.float32, -bnd, bnd))

    def conv(k, fo, ksz):
        kw, kb = jax.random.split(k)
        bnd = 1.0 / np.sqrt(ksz)                 # in_channels = 1
        return (jax.random.uniform(kw, (fo, ksz), jnp.float32, -bnd, bnd),
                jax.random.uniform(kb, (fo,), jnp.float32, -bnd, bnd))

    return {
        "conv": [conv(ks[0], F, ksize), conv(ks[1], F, ksize), conv(ks[2], F, ksize)],
        "dense1": lin(ks[3], D0, H1),
        "dense2": lin(ks[4], H1, H2),
        "dense3": lin(ks[5], H2, H3),
        "dense4": lin(ks[6], H3, H4),
        "output_layer": lin(ks[7], H4, P),
        "output_layerf": lin(ks[8], F, 1),
    }


if __name__ == "__main__":
    # Small, structurally-consistent config:
    B, C, L = 2, 6, 16          # batch, enc channels (>=6 used), seq_len
    ksize = 2                   # conv kernel size
    F = 16                      # num_filters (forced by Linear(16, 1))
    P = 8                       # pred_len / label_len
    # Scaled-down stand-ins for the hard-coded 2442->16384->4096->4096->64 chain.
    hidden = (256, 128, 128, 64)

    key = jax.random.PRNGKey(0)
    kp, kx = jax.random.split(key)
    params = init_params(kp, ksize, F, L, P, hidden)
    inputs = jax.random.normal(kx, (B, C, L), jnp.float32)

    prep = prepare_params(params, B, F)            # pad/transpose/bf16 ONCE
    out = forward(inputs, prep, ksize, F, P)
    out = jax.block_until_ready(out)
    assert out.shape == (B, P, 1), out.shape

    ref = reference(inputs, params, ksize)
    np.testing.assert_allclose(np.asarray(out), np.asarray(ref),
                               rtol=2e-3, atol=2e-3)
    print("KERNEL_OK")
</pallas_src>

<mosaic_0001>
module attributes {stable_mosaic.version = 11 : i64} {
  func.func @conv_feature_kernel(%arg0: i32, %arg1: memref<2x6x16xf32, #tpu.memory_space<vmem>>, %arg2: memref<16x2xf32, #tpu.memory_space<vmem>>, %arg3: memref<16x1xf32, #tpu.memory_space<vmem>>, %arg4: memref<16x2xf32, #tpu.memory_space<vmem>>, %arg5: memref<16x1xf32, #tpu.memory_space<vmem>>, %arg6: memref<16x2xf32, #tpu.memory_space<vmem>>, %arg7: memref<16x1xf32, #tpu.memory_space<vmem>>, %arg8: memref<2x16x256xf32, #tpu.memory_space<vmem>>) attributes {dimension_semantics = [#tpu.dimension_semantics<arbitrary>], iteration_bounds = array<i64: 1>, scalar_prefetch = 0 : i64, scratch_operands = 0 : i64, tpu.core_type = #tpu.core_type<tc>, window_params = [{pipeline_mode = #tpu.pipeline_mode<synchronous>, transform_indices = @transform_0, window_bounds = array<i64: 2, 6, 16>}, {pipeline_mode = #tpu.pipeline_mode<synchronous>, transform_indices = @transform_1, window_bounds = array<i64: 16, 2>}, {pipeline_mode = #tpu.pipeline_mode<synchronous>, transform_indices = @transform_2, window_bounds = array<i64: 16, 1>}, {pipeline_mode = #tpu.pipeline_mode<synchronous>, transform_indices = @transform_3, window_bounds = array<i64: 16, 2>}, {pipeline_mode = #tpu.pipeline_mode<synchronous>, transform_indices = @transform_4, window_bounds = array<i64: 16, 1>}, {pipeline_mode = #tpu.pipeline_mode<synchronous>, transform_indices = @transform_5, window_bounds = array<i64: 16, 2>}, {pipeline_mode = #tpu.pipeline_mode<synchronous>, transform_indices = @transform_6, window_bounds = array<i64: 16, 1>}, {pipeline_mode = #tpu.pipeline_mode<synchronous>, transform_indices = @transform_7, window_bounds = array<i64: 2, 16, 256>}]} {
    %cst = arith.constant 0.000000e+00 : f32
    %0 = vector.broadcast %cst : f32 to vector<2x16x256xf32>
    %c0 = arith.constant 0 : index
    %c0_0 = arith.constant 0 : index
    %c0_1 = arith.constant 0 : index
    %1 = vector.load %arg8[%c0, %c0_0, %c0_1] : memref<2x16x256xf32, #tpu.memory_space<vmem>>, vector<2x16x256xf32>
    tpu.vector_store %arg8[%c0, %c0_0, %c0_1], %0 {strides = array<i32>} : memref<2x16x256xf32, #tpu.memory_space<vmem>>, vector<2x16x256xf32>,
    %c0_2 = arith.constant 0 : index
    %c0_3 = arith.constant 0 : index
    %c0_4 = arith.constant 0 : index
    %2 = vector.load %arg1[%c0_2, %c0_3, %c0_4] : memref<2x6x16xf32, #tpu.memory_space<vmem>>, vector<2x6x16xf32>
    %3 = vector.extract_strided_slice %2 {offsets = [0, 0, 0], sizes = [2, 1, 16], strides = [1, 1, 1]} : vector<2x6x16xf32> to vector<2x1x16xf32>
    %4 = vector.shape_cast %3 : vector<2x1x16xf32> to vector<2x16xf32>
    %c0_5 = arith.constant 0 : index
    %c0_6 = arith.constant 0 : index
    %5 = vector.load %arg2[%c0_5, %c0_6] : memref<16x2xf32, #tpu.memory_space<vmem>>, vector<16x2xf32>
    %c0_7 = arith.constant 0 : index
    %c0_8 = arith.constant 0 : index
    %6 = vector.load %arg3[%c0_7, %c0_8] : memref<16x1xf32, #tpu.memory_space<vmem>>, vector<16x1xf32>
    %cst_9 = arith.constant 0.000000e+00 : f32
    %7 = vector.broadcast %cst_9 : f32 to vector<2x16x15xf32>
    %8 = vector.extract_strided_slice %4 {offsets = [0, 0], sizes = [2, 15], strides = [1, 1]} : vector<2x16xf32> to vector<2x15xf32>
    %9 = vector.shape_cast %8 : vector<2x15xf32> to vector<2x1x15xf32>
    %10 = vector.extract_strided_slice %5 {offsets = [0, 0], sizes = [16, 1], strides = [1, 1]} : vector<16x2xf32> to vector<16x1xf32>
    %11 = vector.shape_cast %10 : vector<16x1xf32> to vector<1x16x1xf32>
    %12 = vector.broadcast %9 : vector<2x1x15xf32> to vector<2x16x15xf32>
    %13 = vector.broadcast %11 : vector<1x16x1xf32> to vector<2x16x15xf32>
    %14 = arith.mulf %12, %13 : vector<2x16x15xf32>
    %15 = arith.addf %7, %14 : vector<2x16x15xf32>
    %16 = vector.extract_strided_slice %4 {offsets = [0, 1], sizes = [2, 15], strides = [1, 1]} : vector<2x16xf32> to vector<2x15xf32>
    %17 = vector.shape_cast %16 : vector<2x15xf32> to vector<2x1x15xf32>
    %18 = vector.extract_strided_slice %5 {offsets = [0, 1], sizes = [16, 1], strides = [1, 1]} : vector<16x2xf32> to vector<16x1xf32>
    %19 = vector.shape_cast %18 : vector<16x1xf32> to vector<1x16x1xf32>
    %20 = vector.broadcast %17 : vector<2x1x15xf32> to vector<2x16x15xf32>
    %21 = vector.broadcast %19 : vector<1x16x1xf32> to vector<2x16x15xf32>
    %22 = arith.mulf %20, %21 : vector<2x16x15xf32>
    %23 = arith.addf %15, %22 : vector<2x16x15xf32>
    %24 = vector.shape_cast %6 : vector<16x1xf32> to vector<1x16x1xf32>
    %25 = vector.broadcast %24 : vector<1x16x1xf32> to vector<2x16x15xf32>
    %26 = arith.addf %23, %25 : vector<2x16x15xf32>
    %cst_10 = arith.constant 0.000000e+00 : f32
    %27 = vector.broadcast %cst_10 : f32 to vector<2x16x15xf32>
    %28 = arith.maximumf %26, %27 : vector<2x16x15xf32>
    %c0_11 = arith.constant 0 : index
    %c0_12 = arith.constant 0 : index
    %c0_13 = arith.constant 0 : index
    %29 = vector.load %arg8[%c0_11, %c0_12, %c0_13] : memref<2x16x256xf32, #tpu.memory_space<vmem>>, vector<2x16x15xf32>
    tpu.vector_store %arg8[%c0_11, %c0_12, %c0_13], %28 {strides = array<i32>} : memref<2x16x256xf32, #tpu.memory_space<vmem>>, vector<2x16x15xf32>,
    %c0_14 = arith.constant 0 : index
    %c0_15 = arith.constant 0 : index
    %30 = vector.load %arg4[%c0_14, %c0_15] : memref<16x2xf32, #tpu.memory_space<vmem>>, vector<16x2xf32>
    %c0_16 = arith.constant 0 : index
    %c0_17 = arith.constant 0 : index
    %31 = vector.load %arg5[%c0_16, %c0_17] : memref<16x1xf32, #tpu.memory_space<vmem>>, vector<16x1xf32>
    %cst_18 = arith.constant 0.000000e+00 : f32
    %32 = vector.broadcast %cst_18 : f32 to vector<2x16x14xf32>
    %33 = vector.extract_strided_slice %4 {offsets = [0, 0], sizes = [2, 14], strides = [1, 1]} : vector<2x16xf32> to vector<2x14xf32>
    %34 = vector.shape_cast %33 : vector<2x14xf32> to vector<2x1x14xf32>
    %35 = vector.extract_strided_slice %30 {offsets = [0, 0], sizes = [16, 1], strides = [1, 1]} : vector<16x2xf32> to vector<16x1xf32>
    %36 = vector.shape_cast %35 : vector<16x1xf32> to vector<1x16x1xf32>
    %37 = vector.broadcast %34 : vector<2x1x14xf32> to vector<2x16x14xf32>
    %38 = vector.broadcast %36 : vector<1x16x1xf32> to vector<2x16x14xf32>
    %39 = arith.mulf %37, %38 : vector<2x16x14xf32>
    %40 = arith.addf %32, %39 : vector<2x16x14xf32>
    %41 = vector.extract_strided_slice %4 {offsets = [0, 2], sizes = [2, 14], strides = [1, 1]} : vector<2x16xf32> to vector<2x14xf32>
    %42 = vector.shape_cast %41 : vector<2x14xf32> to vector<2x1x14xf32>
    %43 = vector.extract_strided_slice %30 {offsets = [0, 1], sizes = [16, 1], strides = [1, 1]} : vector<16x2xf32> to vector<16x1xf32>
    %44 = vector.shape_cast %43 : vector<16x1xf32> to vector<1x16x1xf32>
    %45 = vector.broadcast %42 : vector<2x1x14xf32> to vector<2x16x14xf32>
    %46 = vector.broadcast %44 : vector<1x16x1xf32> to vector<2x16x14xf32>
    %47 = arith.mulf %45, %46 : vector<2x16x14xf32>
    %48 = arith.addf %40, %47 : vector<2x16x14xf32>
    %49 = vector.shape_cast %31 : vector<16x1xf32> to vector<1x16x1xf32>
    %50 = vector.broadcast %49 : vector<1x16x1xf32> to vector<2x16x14xf32>
    %51 = arith.addf %48, %50 : vector<2x16x14xf32>
    %cst_19 = arith.constant 0.000000e+00 : f32
    %52 = vector.broadcast %cst_19 : f32 to vector<2x16x14xf32>
    %53 = arith.maximumf %51, %52 : vector<2x16x14xf32>
    %c0_20 = arith.constant 0 : index
    %c0_21 = arith.constant 0 : index
    %c15 = arith.constant 15 : index
    %54 = vector.load %arg8[%c0_20, %c0_21, %c15] : memref<2x16x256xf32, #tpu.memory_space<vmem>>, vector<2x16x14xf32>
    tpu.vector_store %arg8[%c0_20, %c0_21, %c15], %53 {strides = array<i32>} : memref<2x16x256xf32, #tpu.memory_space<vmem>>, vector<2x16x14xf32>,
    %c0_22 = arith.constant 0 : index
    %c0_23 = arith.constant 0 : index
    %55 = vector.load %arg6[%c0_22, %c0_23] : memref<16x2xf32, #tpu.memory_space<vmem>>, vector<16x2xf32>
    %c0_24 = arith.constant 0 : index
    %c0_25 = arith.constant 0 : index
    %56 = vector.load %arg7[%c0_24, %c0_25] : memref<16x1xf32, #tpu.memory_space<vmem>>, vector<16x1xf32>
    %cst_26 = arith.constant 0.000000e+00 : f32
    %57 = vector.broadcast %cst_26 : f32 to vector<2x16x12xf32>
    %58 = vector.extract_strided_slice %4 {offsets = [0, 0], sizes = [2, 12], strides = [1, 1]} : vector<2x16xf32> to vector<2x12xf32>
    %59 = vector.shape_cast %58 : vector<2x12xf32> to vector<2x1x12xf32>
    %60 = vector.extract_strided_slice %55 {offsets = [0, 0], sizes = [16, 1], strides = [1, 1]} : vector<16x2xf32> to vector<16x1xf32>
    %61 = vector.shape_cast %60 : vector<16x1xf32> to vector<1x16x1xf32>
    %62 = vector.broadcast %59 : vector<2x1x12xf32> to vector<2x16x12xf32>
    %63 = vector.broadcast %61 : vector<1x16x1xf32> to vector<2x16x12xf32>
    %64 = arith.mulf %62, %63 : vector<2x16x12xf32>
    %65 = arith.addf %57, %64 : vector<2x16x12xf32>
    %66 = vector.extract_strided_slice %4 {offsets = [0, 4], sizes = [2, 12], strides = [1, 1]} : vector<2x16xf32> to vector<2x12xf32>
    %67 = vector.shape_cast %66 : vector<2x12xf32> to vector<2x1x12xf32>
    %68 = vector.extract_strided_slice %55 {offsets = [0, 1], sizes = [16, 1], strides = [1, 1]} : vector<16x2xf32> to vector<16x1xf32>
    %69 = vector.shape_cast %68 : vector<16x1xf32> to vector<1x16x1xf32>
    %70 = vector.broadcast %67 : vector<2x1x12xf32> to vector<2x16x12xf32>
    %71 = vector.broadcast %69 : vector<1x16x1xf32> to vector<2x16x12xf32>
    %72 = arith.mulf %70, %71 : vector<2x16x12xf32>
    %73 = arith.addf %65, %72 : vector<2x16x12xf32>
    %74 = vector.shape_cast %56 : vector<16x1xf32> to vector<1x16x1xf32>
    %75 = vector.broadcast %74 : vector<1x16x1xf32> to vector<2x16x12xf32>
    %76 = arith.addf %73, %75 : vector<2x16x12xf32>
    %cst_27 = arith.constant 0.000000e+00 : f32
    %77 = vector.broadcast %cst_27 : f32 to vector<2x16x12xf32>
    %78 = arith.maximumf %76, %77 : vector<2x16x12xf32>
    %c0_28 = arith.constant 0 : index
    %c0_29 = arith.constant 0 : index
    %c29 = arith.constant 29 : index
    %79 = vector.load %arg8[%c0_28, %c0_29, %c29] : memref<2x16x256xf32, #tpu.memory_space<vmem>>, vector<2x16x12xf32>
    tpu.vector_store %arg8[%c0_28, %c0_29, %c29], %78 {strides = array<i32>} : memref<2x16x256xf32, #tpu.memory_space<vmem>>, vector<2x16x12xf32>,
    %80 = vector.extract_strided_slice %2 {offsets = [0, 1, 0], sizes = [2, 1, 16], strides = [1, 1, 1]} : vector<2x6x16xf32> to vector<2x1x16xf32>
    %81 = vector.shape_cast %80 : vector<2x1x16xf32> to vector<2x16xf32>
    %c0_30 = arith.constant 0 : index
    %c0_31 = arith.constant 0 : index
    %82 = vector.load %arg2[%c0_30, %c0_31] : memref<16x2xf32, #tpu.memory_space<vmem>>, vector<16x2xf32>
    %c0_32 = arith.constant 0 : index
    %c0_33 = arith.constant 0 : index
    %83 = vector.load %arg3[%c0_32, %c0_33] : memref<16x1xf32, #tpu.memory_space<vmem>>, vector<16x1xf32>
    %cst_34 = arith.constant 0.000000e+00 : f32
    %84 = vector.broadcast %cst_34 : f32 to vector<2x16x15xf32>
    %85 = vector.extract_strided_slice %81 {offsets = [0, 0], sizes = [2, 15], strides = [1, 1]} : vector<2x16xf32> to vector<2x15xf32>
    %86 = vector.shape_cast %85 : vector<2x15xf32> to vector<2x1x15xf32>
    %87 = vector.extract_strided_slice %82 {offsets = [0, 0], sizes = [16, 1], strides = [1, 1]} : vector<16x2xf32> to vector<16x1xf32>
    %88 = vector.shape_cast %87 : vector<16x1xf32> to vector<1x16x1xf32>
    %89 = vector.broadcast %86 : vector<2x1x15xf32> to vector<2x16x15xf32>
    %90 = vector.broadcast %88 : vector<1x16x1xf32> to vector<2x16x15xf32>
    %91 = arith.mulf %89, %90 : vector<2x16x15xf32>
    %92 = arith.addf %84, %91 : vector<2x16x15xf32>
    %93 = vector.extract_strided_slice %81 {offsets = [0, 1], sizes = [2, 15], strides = [1, 1]} : vector<2x16xf32> to vector<2x15xf32>
    %94 = vector.shape_cast %93 : vector<2x15xf32> to vector<2x1x15xf32>
    %95 = vector.extract_strided_slice %82 {offsets = [0, 1], sizes = [16, 1], strides = [1, 1]} : vector<16x2xf32> to vector<16x1xf32>
    %96 = vector.shape_cast %95 : vector<16x1xf32> to vector<1x16x1xf32>
    %97 = vector.broadcast %94 : vector<2x1x15xf32> to vector<2x16x15xf32>
    %98 = vector.broadcast %96 : vector<1x16x1xf32> to vector<2x16x15xf32>
    %99 = arith.mulf %97, %98 : vector<2x16x15xf32>
    %100 = arith.addf %92, %99 : vector<2x16x15xf32>
    %101 = vector.shape_cast %83 : vector<16x1xf32> to vector<1x16x1xf32>
    %102 = vector.broadcast %101 : vector<1x16x1xf32> to vector<2x16x15xf32>
    %103 = arith.addf %100, %102 : vector<2x16x15xf32>
    %cst_35 = arith.constant 0.000000e+00 : f32
    %104 = vector.broadcast %cst_35 : f32 to vector<2x16x15xf32>
    %105 = arith.maximumf %103, %104 : vector<2x16x15xf32>
    %c0_36 = arith.constant 0 : index
    %c0_37 = arith.constant 0 : index
    %c41 = arith.constant 41 : index
    %106 = vector.load %arg8[%c0_36, %c0_37, %c41] : memref<2x16x256xf32, #tpu.memory_space<vmem>>, vector<2x16x15xf32>
    tpu.vector_store %arg8[%c0_36, %c0_37, %c41], %105 {strides = array<i32>} : memref<2x16x256xf32, #tpu.memory_space<vmem>>, vector<2x16x15xf32>,
    %c0_38 = arith.constant 0 : index
    %c0_39 = arith.constant 0 : index
    %107 = vector.load %arg4[%c0_38, %c0_39] : memref<16x2xf32, #tpu.memory_space<vmem>>, vector<16x2xf32>
    %c0_40 = arith.constant 0 : index
    %c0_41 = arith.constant 0 : index
    %108 = vector.load %arg5[%c0_40, %c0_41] : memref<16x1xf32, #tpu.memory_space<vmem>>, vector<16x1xf32>
    %cst_42 = arith.constant 0.000000e+00 : f32
    %109 = vector.broadcast %cst_42 : f32 to vector<2x16x14xf32>
    %110 = vector.extract_strided_slice %81 {offsets = [0, 0], sizes = [2, 14], strides = [1, 1]} : vector<2x16xf32> to vector<2x14xf32>
    %111 = vector.shape_cast %110 : vector<2x14xf32> to vector<2x1x14xf32>
    %112 = vector.extract_strided_slice %107 {offsets = [0, 0], sizes = [16, 1], strides = [1, 1]} : vector<16x2xf32> to vector<16x1xf32>
    %113 = vector.shape_cast %112 : vector<16x1xf32> to vector<1x16x1xf32>
    %114 = vector.broadcast %111 : vector<2x1x14xf32> to vector<2x16x14xf32>
    %115 = vector.broadcast %113 : vector<1x16x1xf32> to vector<2x16x14xf32>
    %116 = arith.mulf %114, %115 : vector<2x16x14xf32>
    %117 = arith.addf %109, %116 : vector<2x16x14xf32>
    %118 = vector.extract_strided_slice %81 {offsets = [0, 2], sizes = [2, 14], strides = [1, 1]} : vector<2x16xf32> to vector<2x14xf32>
    %119 = vector.shape_cast %118 : vector<2x14xf32> to vector<2x1x14xf32>
    %120 = vector.extract_strided_slice %107 {offsets = [0, 1], sizes = [16, 1], strides = [1, 1]} : vector<16x2xf32> to vector<16x1xf32>
    %121 = vector.shape_cast %120 : vector<16x1xf32> to vector<1x16x1xf32>
    %122 = vector.broadcast %119 : vector<2x1x14xf32> to vector<2x16x14xf32>
    %123 = vector.broadcast %121 : vector<1x16x1xf32> to vector<2x16x14xf32>
    %124 = arith.mulf %122, %123 : vector<2x16x14xf32>
    %125 = arith.addf %117, %124 : vector<2x16x14xf32>
    %126 = vector.shape_cast %108 : vector<16x1xf32> to vector<1x16x1xf32>
    %127 = vector.broadcast %126 : vector<1x16x1xf32> to vector<2x16x14xf32>
    %128 = arith.addf %125, %127 : vector<2x16x14xf32>
    %cst_43 = arith.constant 0.000000e+00 : f32
    %129 = vector.broadcast %cst_43 : f32 to vector<2x16x14xf32>
    %130 = arith.maximumf %128, %129 : vector<2x16x14xf32>
    %c0_44 = arith.constant 0 : index
    %c0_45 = arith.constant 0 : index
    %c56 = arith.constant 56 : index
    %131 = vector.load %arg8[%c0_44, %c0_45, %c56] : memref<2x16x256xf32, #tpu.memory_space<vmem>>, vector<2x16x14xf32>
    tpu.vector_store %arg8[%c0_44, %c0_45, %c56], %130 {strides = array<i32>} : memref<2x16x256xf32, #tpu.memory_space<vmem>>, vector<2x16x14xf32>,
    %c0_46 = arith.constant 0 : index
    %c0_47 = arith.constant 0 : index
    %132 = vector.load %arg6[%c0_46, %c0_47] : memref<16x2xf32, #tpu.memory_space<vmem>>, vector<16x2xf32>
    %c0_48 = arith.constant 0 : index
    %c0_49 = arith.constant 0 : index
    %133 = vector.load %arg7[%c0_48, %c0_49] : memref<16x1xf32, #tpu.memory_space<vmem>>, vector<16x1xf32>
    %cst_50 = arith.constant 0.000000e+00 : f32
    %134 = vector.broadcast %cst_50 : f32 to vector<2x16x12xf32>
    %135 = vector.extract_strided_slice %81 {offsets = [0, 0], sizes = [2, 12], strides = [1, 1]} : vector<2x16xf32> to vector<2x12xf32>
    %136 = vector.shape_cast %135 : vector<2x12xf32> to vector<2x1x12xf32>
    %137 = vector.extract_strided_slice %132 {offsets = [0, 0], sizes = [16, 1], strides = [1, 1]} : vector<16x2xf32> to vector<16x1xf32>
    %138 = vector.shape_cast %137 : vector<16x1xf32> to vector<1x16x1xf32>
    %139 = vector.broadcast %136 : vector<2x1x12xf32> to vector<2x16x12xf32>
    %140 = vector.broadcast %138 : vector<1x16x1xf32> to vector<2x16x12xf32>
    %141 = arith.mulf %139, %140 : vector<2x16x12xf32>
    %142 = arith.addf %134, %141 : vector<2x16x12xf32>
    %143 = vector.extract_strided_slice %81 {offsets = [0, 4], sizes = [2, 12], strides = [1, 1]} : vector<2x16xf32> to vector<2x12xf32>
    %144 = vector.shape_cast %143 : vector<2x12xf32> to vector<2x1x12xf32>
    %145 = vector.extract_strided_slice %132 {offsets = [0, 1], sizes = [16, 1], strides = [1, 1]} : vector<16x2xf32> to vector<16x1xf32>
    %146 = vector.shape_cast %145 : vector<16x1xf32> to vector<1x16x1xf32>
    %147 = vector.broadcast %144 : vector<2x1x12xf32> to vector<2x16x12xf32>
    %148 = vector.broadcast %146 : vector<1x16x1xf32> to vector<2x16x12xf32>
    %149 = arith.mulf %147, %148 : vector<2x16x12xf32>
    %150 = arith.addf %142, %149 : vector<2x16x12xf32>
    %151 = vector.shape_cast %133 : vector<16x1xf32> to vector<1x16x1xf32>
    %152 = vector.broadcast %151 : vector<1x16x1xf32> to vector<2x16x12xf32>
    %153 = arith.addf %150, %152 : vector<2x16x12xf32>
    %cst_51 = arith.constant 0.000000e+00 : f32
    %154 = vector.broadcast %cst_51 : f32 to vector<2x16x12xf32>
    %155 = arith.maximumf %153, %154 : vector<2x16x12xf32>
    %c0_52 = arith.constant 0 : index
    %c0_53 = arith.constant 0 : index
    %c70 = arith.constant 70 : index
    %156 = vector.load %arg8[%c0_52, %c0_53, %c70] : memref<2x16x256xf32, #tpu.memory_space<vmem>>, vector<2x16x12xf32>
    tpu.vector_store %arg8[%c0_52, %c0_53, %c70], %155 {strides = array<i32>} : memref<2x16x256xf32, #tpu.memory_space<vmem>>, vector<2x16x12xf32>,
    %157 = vector.extract_strided_slice %2 {offsets = [0, 2, 0], sizes = [2, 1, 16], strides = [1, 1, 1]} : vector<2x6x16xf32> to vector<2x1x16xf32>
    %158 = vector.shape_cast %157 : vector<2x1x16xf32> to vector<2x16xf32>
    %c0_54 = arith.constant 0 : index
    %c0_55 = arith.constant 0 : index
    %159 = vector.load %arg2[%c0_54, %c0_55] : memref<16x2xf32, #tpu.memory_space<vmem>>, vector<16x2xf32>
    %c0_56 = arith.constant 0 : index
    %c0_57 = arith.constant 0 : index
    %160 = vector.load %arg3[%c0_56, %c0_57] : memref<16x1xf32, #tpu.memory_space<vmem>>, vector<16x1xf32>
    %cst_58 = arith.constant 0.000000e+00 : f32
    %161 = vector.broadcast %cst_58 : f32 to vector<2x16x15xf32>
    %162 = vector.extract_strided_slice %158 {offsets = [0, 0], sizes = [2, 15], strides = [1, 1]} : vector<2x16xf32> to vector<2x15xf32>
    %163 = vector.shape_cast %162 : vector<2x15xf32> to vector<2x1x15xf32>
    %164 = vector.extract_strided_slice %159 {offsets = [0, 0], sizes = [16, 1], strides = [1, 1]} : vector<16x2xf32> to vector<16x1xf32>
    %165 = vector.shape_cast %164 : vector<16x1xf32> to vector<1x16x1xf32>
    %166 = vector.broadcast %163 : vector<2x1x15xf32> to vector<2x16x15xf32>
    %167 = vector.broadcast %165 : vector<1x16x1xf32> to vector<2x16x15xf32>
    %168 = arith.mulf %166, %167 : vector<2x16x15xf32>
    %169 = arith.addf %161, %168 : vector<2x16x15xf32>
    %170 = vector.extract_strided_slice %158 {offsets = [0, 1], sizes = [2, 15], strides = [1, 1]} : vector<2x16xf32> to vector<2x15xf32>
    %171 = vector.shape_cast %170 : vector<2x15xf32> to vector<2x1x15xf32>
    %172 = vector.extract_strided_slice %159 {offsets = [0, 1], sizes = [16, 1], strides = [1, 1]} : vector<16x2xf32> to vector<16x1xf32>
    %173 = vector.shape_cast %172 : vector<16x1xf32> to vector<1x16x1xf32>
    %174 = vector.broadcast %171 : vector<2x1x15xf32> to vector<2x16x15xf32>
    %175 = vector.broadcast %173 : vector<1x16x1xf32> to vector<2x16x15xf32>
    %176 = arith.mulf %174, %175 : vector<2x16x15xf32>
    %177 = arith.addf %169, %176 : vector<2x16x15xf32>
    %178 = vector.shape_cast %160 : vector<16x1xf32> to vector<1x16x1xf32>
    %179 = vector.broadcast %178 : vector<1x16x1xf32> to vector<2x16x15xf32>
    %180 = arith.addf %177, %179 : vector<2x16x15xf32>
    %cst_59 = arith.constant 0.000000e+00 : f32
    %181 = vector.broadcast %cst_59 : f32 to vector<2x16x15xf32>
    %182 = arith.maximumf %180, %181 : vector<2x16x15xf32>
    %c0_60 = arith.constant 0 : index
    %c0_61 = arith.constant 0 : index
    %c82 = arith.constant 82 : index
    %183 = vector.load %arg8[%c0_60, %c0_61, %c82] : memref<2x16x256xf32, #tpu.memory_space<vmem>>, vector<2x16x15xf32>
    tpu.vector_store %arg8[%c0_60, %c0_61, %c82], %182 {strides = array<i32>} : memref<2x16x256xf32, #tpu.memory_space<vmem>>, vector<2x16x15xf32>,
    %c0_62 = arith.constant 0 : index
    %c0_63 = arith.constant 0 : index
    %184 = vector.load %arg4[%c0_62, %c0_63] : memref<16x2xf32, #tpu.memory_space<vmem>>, vector<16x2xf32>
    %c0_64 = arith.constant 0 : index
    %c0_65 = arith.constant 0 : index
    %185 = vector.load %arg5[%c0_64, %c0_65] : memref<16x1xf32, #tpu.memory_space<vmem>>, vector<16x1xf32>
    %cst_66 = arith.constant 0.000000e+00 : f32
    %186 = vector.broadcast %cst_66 : f32 to vector<2x16x14xf32>
    %187 = vector.extract_strided_slice %158 {offsets = [0, 0], sizes = [2, 14], strides = [1, 1]} : vector<2x16xf32> to vector<2x14xf32>
    %188 = vector.shape_cast %187 : vector<2x14xf32> to vector<2x1x14xf32>
    %189 = vector.extract_strided_slice %184 {offsets = [0, 0], sizes = [16, 1], strides = [1, 1]} : vector<16x2xf32> to vector<16x1xf32>
    %190 = vector.shape_cast %189 : vector<16x1xf32> to vector<1x16x1xf32>
    %191 = vector.broadcast %188 : vector<2x1x14xf32> to vector<2x16x14xf32>
    %192 = vector.broadcast %190 : vector<1x16x1xf32> to vector<2x16x14xf32>
    %193 = arith.mulf %191, %192 : vector<2x16x14xf32>
    %194 = arith.addf %186, %193 : vector<2x16x14xf32>
    %195 = vector.extract_strided_slice %158 {offsets = [0, 2], sizes = [2, 14], strides = [1, 1]} : vector<2x16xf32> to vector<2x14xf32>
    %196 = vector.shape_cast %195 : vector<2x14xf32> to vector<2x1x14xf32>
    %197 = vector.extract_strided_slice %184 {offsets = [0, 1], sizes = [16, 1], strides = [1, 1]} : vector<16x2xf32> to vector<16x1xf32>
    %198 = vector.shape_cast %197 : vector<16x1xf32> to vector<1x16x1xf32>
    %199 = vector.broadcast %196 : vector<2x1x14xf32> to vector<2x16x14xf32>
    %200 = vector.broadcast %198 : vector<1x16x1xf32> to vector<2x16x14xf32>
    %201 = arith.mulf %199, %200 : vector<2x16x14xf32>
    %202 = arith.addf %194, %201 : vector<2x16x14xf32>
    %203 = vector.shape_cast %185 : vector<16x1xf32> to vector<1x16x1xf32>
    %204 = vector.broadcast %203 : vector<1x16x1xf32> to vector<2x16x14xf32>
    %205 = arith.addf %202, %204 : vector<2x16x14xf32>
    %cst_67 = arith.constant 0.000000e+00 : f32
    %206 = vector.broadcast %cst_67 : f32 to vector<2x16x14xf32>
    %207 = arith.maximumf %205, %206 : vector<2x16x14xf32>
    %c0_68 = arith.constant 0 : index
    %c0_69 = arith.constant 0 : index
    %c97 = arith.constant 97 : index
    %208 = vector.load %arg8[%c0_68, %c0_69, %c97] : memref<2x16x256xf32, #tpu.memory_space<vmem>>, vector<2x16x14xf32>
    tpu.vector_store %arg8[%c0_68, %c0_69, %c97], %207 {strides = array<i32>} : memref<2x16x256xf32, #tpu.memory_space<vmem>>, vector<2x16x14xf32>,
    %c0_70 = arith.constant 0 : index
    %c0_71 = arith.constant 0 : index
    %209 = vector.load %arg6[%c0_70, %c0_71] : memref<16x2xf32, #tpu.memory_space<vmem>>, vector<16x2xf32>
    %c0_72 = arith.constant 0 : index
    %c0_73 = arith.constant 0 : index
    %210 = vector.load %arg7[%c0_72, %c0_73] : memref<16x1xf32, #tpu.memory_space<vmem>>, vector<16x1xf32>
    %cst_74 = arith.constant 0.000000e+00 : f32
    %211 = vector.broadcast %cst_74 : f32 to vector<2x16x12xf32>
    %212 = vector.extract_strided_slice %158 {offsets = [0, 0], sizes = [2, 12], strides = [1, 1]} : vector<2x16xf32> to vector<2x12xf32>
    %213 = vector.shape_cast %212 : vector<2x12xf32> to vector<2x1x12xf32>
    %214 = vector.extract_strided_slice %209 {offsets = [0, 0], sizes = [16, 1], strides = [1, 1]} : vector<16x2xf32> to vector<16x1xf32>
    %215 = vector.shape_cast %214 : vector<16x1xf32> to vector<1x16x1xf32>
    %216 = vector.broadcast %213 : vector<2x1x12xf32> to vector<2x16x12xf32>
    %217 = vector.broadcast %215 : vector<1x16x1xf32> to vector<2x16x12xf32>
    %218 = arith.mulf %216, %217 : vector<2x16x12xf32>
    %219 = arith.addf %211, %218 : vector<2x16x12xf32>
    %220 = vector.extract_strided_slice %158 {offsets = [0, 4], sizes = [2, 12], strides = [1, 1]} : vector<2x16xf32> to vector<2x12xf32>
    %221 = vector.shape_cast %220 : vector<2x12xf32> to vector<2x1x12xf32>
    %222 = vector.extract_strided_slice %209 {offsets = [0, 1], sizes = [16, 1], strides = [1, 1]} : vector<16x2xf32> to vector<16x1xf32>
    %223 = vector.shape_cast %222 : vector<16x1xf32> to vector<1x16x1xf32>
    %224 = vector.broadcast %221 : vector<2x1x12xf32> to vector<2x16x12xf32>
    %225 = vector.broadcast %223 : vector<1x16x1xf32> to vector<2x16x12xf32>
    %226 = arith.mulf %224, %225 : vector<2x16x12xf32>
    %227 = arith.addf %219, %226 : vector<2x16x12xf32>
    %228 = vector.shape_cast %210 : vector<16x1xf32> to vector<1x16x1xf32>
    %229 = vector.broadcast %228 : vector<1x16x1xf32> to vector<2x16x12xf32>
    %230 = arith.addf %227, %229 : vector<2x16x12xf32>
    %cst_75 = arith.constant 0.000000e+00 : f32
    %231 = vector.broadcast %cst_75 : f32 to vector<2x16x12xf32>
    %232 = arith.maximumf %230, %231 : vector<2x16x12xf32>
    %c0_76 = arith.constant 0 : index
    %c0_77 = arith.constant 0 : index
    %c111 = arith.constant 111 : index
    %233 = vector.load %arg8[%c0_76, %c0_77, %c111] : memref<2x16x256xf32, #tpu.memory_space<vmem>>, vector<2x16x12xf32>
    tpu.vector_store %arg8[%c0_76, %c0_77, %c111], %232 {strides = array<i32>} : memref<2x16x256xf32, #tpu.memory_space<vmem>>, vector<2x16x12xf32>,
    %234 = vector.extract_strided_slice %2 {offsets = [0, 3, 0], sizes = [2, 1, 16], strides = [1, 1, 1]} : vector<2x6x16xf32> to vector<2x1x16xf32>
    %235 = vector.shape_cast %234 : vector<2x1x16xf32> to vector<2x16xf32>
    %c0_78 = arith.constant 0 : index
    %c0_79 = arith.constant 0 : index
    %236 = vector.load %arg2[%c0_78, %c0_79] : memref<16x2xf32, #tpu.memory_space<vmem>>, vector<16x2xf32>
    %c0_80 = arith.constant 0 : index
    %c0_81 = arith.constant 0 : index
    %237 = vector.load %arg3[%c0_80, %c0_81] : memref<16x1xf32, #tpu.memory_space<vmem>>, vector<16x1xf32>
    %cst_82 = arith.constant 0.000000e+00 : f32
    %238 = vector.broadcast %cst_82 : f32 to vector<2x16x15xf32>
    %239 = vector.extract_strided_slice %235 {offsets = [0, 0], sizes = [2, 15], strides = [1, 1]} : vector<2x16xf32> to vector<2x15xf32>
    %240 = vector.shape_cast %239 : vector<2x15xf32> to vector<2x1x15xf32>
    %241 = vector.extract_strided_slice %236 {offsets = [0, 0], sizes = [16, 1], strides = [1, 1]} : vector<16x2xf32> to vector<16x1xf32>
    %242 = vector.shape_cast %241 : vector<16x1xf32> to vector<1x16x1xf32>
    %243 = vector.broadcast %240 : vector<2x1x15xf32> to vector<2x16x15xf32>
    %244 = vector.broadcast %242 : vector<1x16x1xf32> to vector<2x16x15xf32>
    %245 = arith.mulf %243, %244 : vector<2x16x15xf32>
    %246 = arith.addf %238, %245 : vector<2x16x15xf32>
    %247 = vector.extract_strided_slice %235 {offsets = [0, 1], sizes = [2, 15], strides = [1, 1]} : vector<2x16xf32> to vector<2x15xf32>
    %248 = vector.shape_cast %247 : vector<2x15xf32> to vector<2x1x15xf32>
    %249 = vector.extract_strided_slice %236 {offsets = [0, 1], sizes = [16, 1], strides = [1, 1]} : vector<16x2xf32> to vector<16x1xf32>
    %250 = vector.shape_cast %249 : vector<16x1xf32> to vector<1x16x1xf32>
    %251 = vector.broadcast %248 : vector<2x1x15xf32> to vector<2x16x15xf32>
    %252 = vector.broadcast %250 : vector<1x16x1xf32> to vector<2x16x15xf32>
    %253 = arith.mulf %251, %252 : vector<2x16x15xf32>
    %254 = arith.addf %246, %253 : vector<2x16x15xf32>
    %255 = vector.shape_cast %237 : vector<16x1xf32> to vector<1x16x1xf32>
    %256 = vector.broadcast %255 : vector<1x16x1xf32> to vector<2x16x15xf32>
    %257 = arith.addf %254, %256 : vector<2x16x15xf32>
    %cst_83 = arith.constant 0.000000e+00 : f32
    %258 = vector.broadcast %cst_83 : f32 to vector<2x16x15xf32>
    %259 = arith.maximumf %257, %258 : vector<2x16x15xf32>
    %c0_84 = arith.constant 0 : index
    %c0_85 = arith.constant 0 : index
    %c123 = arith.constant 123 : index
    %260 = vector.load %arg8[%c0_84, %c0_85, %c123] : memref<2x16x256xf32, #tpu.memory_space<vmem>>, vector<2x16x15xf32>
    tpu.vector_store %arg8[%c0_84, %c0_85, %c123], %259 {strides = array<i32>} : memref<2x16x256xf32, #tpu.memory_space<vmem>>, vector<2x16x15xf32>,
    %c0_86 = arith.constant 0 : index
    %c0_87 = arith.constant 0 : index
    %261 = vector.load %arg4[%c0_86, %c0_87] : memref<16x2xf32, #tpu.memory_space<vmem>>, vector<16x2xf32>
    %c0_88 = arith.constant 0 : index
    %c0_89 = arith.constant 0 : index
    %262 = vector.load %arg5[%c0_88, %c0_89] : memref<16x1xf32, #tpu.memory_space<vmem>>, vector<16x1xf32>
    %cst_90 = arith.constant 0.000000e+00 : f32
    %263 = vector.broadcast %cst_90 : f32 to vector<2x16x14xf32>
    %264 = vector.extract_strided_slice %235 {offsets = [0, 0], sizes = [2, 14], strides = [1, 1]} : vector<2x16xf32> to vector<2x14xf32>
    %265 = vector.shape_cast %264 : vector<2x14xf32> to vector<2x1x14xf32>
    %266 = vector.extract_strided_slice %261 {offsets = [0, 0], sizes = [16, 1], strides = [1, 1]} : vector<16x2xf32> to vector<16x1xf32>
    %267 = vector.shape_cast %266 : vector<16x1xf32> to vector<1x16x1xf32>
    %268 = vector.broadcast %265 : vector<2x1x14xf32> to vector<2x16x14xf32>
    %269 = vector.broadcast %267 : vector<1x16x1xf32> to vector<2x16x14xf32>
    %270 = arith.mulf %268, %269 : vector<2x16x14xf32>
    %271 = arith.addf %263, %270 : vector<2x16x14xf32>
    %272 = vector.extract_strided_slice %235 {offsets = [0, 2], sizes = [2, 14], strides = [1, 1]} : vector<2x16xf32> to vector<2x14xf32>
    %273 = vector.shape_cast %272 : vector<2x14xf32> to vector<2x1x14xf32>
    %274 = vector.extract_strided_slice %261 {offsets = [0, 1], sizes = [16, 1], strides = [1, 1]} : vector<16x2xf32> to vector<16x1xf32>
    %275 = vector.shape_cast %274 : vector<16x1xf32> to vector<1x16x1xf32>
    %276 = vector.broadcast %273 : vector<2x1x14xf32> to vector<2x16x14xf32>
    %277 = vector.broadcast %275 : vector<1x16x1xf32> to vector<2x16x14xf32>
    %278 = arith.mulf %276, %277 : vector<2x16x14xf32>
    %279 = arith.addf %271, %278 : vector<2x16x14xf32>
    %280 = vector.shape_cast %262 : vector<16x1xf32> to vector<1x16x1xf32>
    %281 = vector.broadcast %280 : vector<1x16x1xf32> to vector<2x16x14xf32>
    %282 = arith.addf %279, %281 : vector<2x16x14xf32>
    %cst_91 = arith.constant 0.000000e+00 : f32
    %283 = vector.broadcast %cst_91 : f32 to vector<2x16x14xf32>
    %284 = arith.maximumf %282, %283 : vector<2x16x14xf32>
    %c0_92 = arith.constant 0 : index
    %c0_93 = arith.constant 0 : index
    %c138 = arith.constant 138 : index
    %285 = vector.load %arg8[%c0_92, %c0_93, %c138] : memref<2x16x256xf32, #tpu.memory_space<vmem>>, vector<2x16x14xf32>
    tpu.vector_store %arg8[%c0_92, %c0_93, %c138], %284 {strides = array<i32>} : memref<2x16x256xf32, #tpu.memory_space<vmem>>, vector<2x16x14xf32>,
    %c0_94 = arith.constant 0 : index
    %c0_95 = arith.constant 0 : index
    %286 = vector.load %arg6[%c0_94, %c0_95] : memref<16x2xf32, #tpu.memory_space<vmem>>, vector<16x2xf32>
    %c0_96 = arith.constant 0 : index
    %c0_97 = arith.constant 0 : index
    %287 = vector.load %arg7[%c0_96, %c0_97] : memref<16x1xf32, #tpu.memory_space<vmem>>, vector<16x1xf32>
    %cst_98 = arith.constant 0.000000e+00 : f32
    %288 = vector.broadcast %cst_98 : f32 to vector<2x16x12xf32>
    %289 = vector.extract_strided_slice %235 {offsets = [0, 0], sizes = [2, 12], strides = [1, 1]} : vector<2x16xf32> to vector<2x12xf32>
    %290 = vector.shape_cast %289 : vector<2x12xf32> to vector<2x1x12xf32>
    %291 = vector.extract_strided_slice %286 {offsets = [0, 0], sizes = [16, 1], strides = [1, 1]} : vector<16x2xf32> to vector<16x1xf32>
    %292 = vector.shape_cast %291 : vector<16x1xf32> to vector<1x16x1xf32>
    %293 = vector.broadcast %290 : vector<2x1x12xf32> to vector<2x16x12xf32>
    %294 = vector.broadcast %292 : vector<1x16x1xf32> to vector<2x16x12xf32>
    %295 = arith.mulf %293, %294 : vector<2x16x12xf32>
    %296 = arith.addf %288, %295 : vector<2x16x12xf32>
    %297 = vector.extract_strided_slice %235 {offsets = [0, 4], sizes = [2, 12], strides = [1, 1]} : vector<2x16xf32> to vector<2x12xf32>
    %298 = vector.shape_cast %297 : vector<2x12xf32> to vector<2x1x12xf32>
    %299 = vector.extract_strided_slice %286 {offsets = [0, 1], sizes = [16, 1], strides = [1, 1]} : vector<16x2xf32> to vector<16x1xf32>
    %300 = vector.shape_cast %299 : vector<16x1xf32> to vector<1x16x1xf32>
    %301 = vector.broadcast %298 : vector<2x1x12xf32> to vector<2x16x12xf32>
    %302 = vector.broadcast %300 : vector<1x16x1xf32> to vector<2x16x12xf32>
    %303 = arith.mulf %301, %302 : vector<2x16x12xf32>
    %304 = arith.addf %296, %303 : vector<2x16x12xf32>
    %305 = vector.shape_cast %287 : vector<16x1xf32> to vector<1x16x1xf32>
    %306 = vector.broadcast %305 : vector<1x16x1xf32> to vector<2x16x12xf32>
    %307 = arith.addf %304, %306 : vector<2x16x12xf32>
    %cst_99 = arith.constant 0.000000e+00 : f32
    %308 = vector.broadcast %cst_99 : f32 to vector<2x16x12xf32>
    %309 = arith.maximumf %307, %308 : vector<2x16x12xf32>
    %c0_100 = arith.constant 0 : index
    %c0_101 = arith.constant 0 : index
    %c152 = arith.constant 152 : index
    %310 = vector.load %arg8[%c0_100, %c0_101, %c152] : memref<2x16x256xf32, #tpu.memory_space<vmem>>, vector<2x16x12xf32>
    tpu.vector_store %arg8[%c0_100, %c0_101, %c152], %309 {strides = array<i32>} : memref<2x16x256xf32, #tpu.memory_space<vmem>>, vector<2x16x12xf32>,
    %311 = vector.extract_strided_slice %2 {offsets = [0, 4, 0], sizes = [2, 1, 16], strides = [1, 1, 1]} : vector<2x6x16xf32> to vector<2x1x16xf32>
    %312 = vector.shape_cast %311 : vector<2x1x16xf32> to vector<2x16xf32>
    %c0_102 = arith.constant 0 : index
    %c0_103 = arith.constant 0 : index
    %313 = vector.load %arg2[%c0_102, %c0_103] : memref<16x2xf32, #tpu.memory_space<vmem>>, vector<16x2xf32>
    %c0_104 = arith.constant 0 : index
    %c0_105 = arith.constant 0 : index
    %314 = vector.load %arg3[%c0_104, %c0_105] : memref<16x1xf32, #tpu.memory_space<vmem>>, vector<16x1xf32>
    %cst_106 = arith.constant 0.000000e+00 : f32
    %315 = vector.broadcast %cst_106 : f32 to vector<2x16x15xf32>
    %316 = vector.extract_strided_slice %312 {offsets = [0, 0], sizes = [2, 15], strides = [1, 1]} : vector<2x16xf32> to vector<2x15xf32>
    %317 = vector.shape_cast %316 : vector<2x15xf32> to vector<2x1x15xf32>
    %318 = vector.extract_strided_slice %313 {offsets = [0, 0], sizes = [16, 1], strides = [1, 1]} : vector<16x2xf32> to vector<16x1xf32>
    %319 = vector.shape_cast %318 : vector<16x1xf32> to vector<1x16x1xf32>
    %320 = vector.broadcast %317 : vector<2x1x15xf32> to vector<2x16x15xf32>
    %321 = vector.broadcast %319 : vector<1x16x1xf32> to vector<2x16x15xf32>
    %322 = arith.mulf %320, %321 : vector<2x16x15xf32>
    %323 = arith.addf %315, %322 : vector<2x16x15xf32>
    %324 = vector.extract_strided_slice %312 {offsets = [0, 1], sizes = [2, 15], strides = [1, 1]} : vector<2x16xf32> to vector<2x15xf32>
    %325 = vector.shape_cast %324 : vector<2x15xf32> to vector<2x1x15xf32>
    %326 = vector.extract_strided_slice %313 {offsets = [0, 1], sizes = [16, 1], strides = [1, 1]} : vector<16x2xf32> to vector<16x1xf32>
    %327 = vector.shape_cast %326 : vector<16x1xf32> to vector<1x16x1xf32>
    %328 = vector.broadcast %325 : vector<2x1x15xf32> to vector<2x16x15xf32>
    %329 = vector.broadcast %327 : vector<1x16x1xf32> to vector<2x16x15xf32>
    %330 = arith.mulf %328, %329 : vector<2x16x15xf32>
    %331 = arith.addf %323, %330 : vector<2x16x15xf32>
    %332 = vector.shape_cast %314 : vector<16x1xf32> to vector<1x16x1xf32>
    %333 = vector.broadcast %332 : vector<1x16x1xf32> to vector<2x16x15xf32>
    %334 = arith.addf %331, %333 : vector<2x16x15xf32>
    %cst_107 = arith.constant 0.000000e+00 : f32
    %335 = vector.broadcast %cst_107 : f32 to vector<2x16x15xf32>
    %336 = arith.maximumf %334, %335 : vector<2x16x15xf32>
    %c0_108 = arith.constant 0 : index
    %c0_109 = arith.constant 0 : index
    %c164 = arith.constant 164 : index
    %337 = vector.load %arg8[%c0_108, %c0_109, %c164] : memref<2x16x256xf32, #tpu.memory_space<vmem>>, vector<2x16x15xf32>
    tpu.vector_store %arg8[%c0_108, %c0_109, %c164], %336 {strides = array<i32>} : memref<2x16x256xf32, #tpu.memory_space<vmem>>, vector<2x16x15xf32>,
    %c0_110 = arith.constant 0 : index
    %c0_111 = arith.constant 0 : index
    %338 = vector.load %arg4[%c0_110, %c0_111] : memref<16x2xf32, #tpu.memory_space<vmem>>, vector<16x2xf32>
    %c0_112 = arith.constant 0 : index
    %c0_113 = arith.constant 0 : index
    %339 = vector.load %arg5[%c0_112, %c0_113] : memref<16x1xf32, #tpu.memory_space<vmem>>, vector<16x1xf32>
    %cst_114 = arith.constant 0.000000e+00 : f32
    %340 = vector.broadcast %cst_114 : f32 to vector<2x16x14xf32>
    %341 = vector.extract_strided_slice %312 {offsets = [0, 0], sizes = [2, 14], strides = [1, 1]} : vector<2x16xf32> to vector<2x14xf32>
    %342 = vector.shape_cast %341 : vector<2x14xf32> to vector<2x1x14xf32>
    %343 = vector.extract_strided_slice %338 {offsets = [0, 0], sizes = [16, 1], strides = [1, 1]} : vector<16x2xf32> to vector<16x1xf32>
    %344 = vector.shape_cast %343 : vector<16x1xf32> to vector<1x16x1xf32>
    %345 = vector.broadcast %342 : vector<2x1x14xf32> to vector<2x16x14xf32>
    %346 = vector.broadcast %344 : vector<1x16x1xf32> to vector<2x16x14xf32>
    %347 = arith.mulf %345, %346 : vector<2x16x14xf32>
    %348 = arith.addf %340, %347 : vector<2x16x14xf32>
    %349 = vector.extract_strided_slice %312 {offsets = [0, 2], sizes = [2, 14], strides = [1, 1]} : vector<2x16xf32> to vector<2x14xf32>
    %350 = vector.shape_cast %349 : vector<2x14xf32> to vector<2x1x14xf32>
    %351 = vector.extract_strided_slice %338 {offsets = [0, 1], sizes = [16, 1], strides = [1, 1]} : vector<16x2xf32> to vector<16x1xf32>
    %352 = vector.shape_cast %351 : vector<16x1xf32> to vector<1x16x1xf32>
    %353 = vector.broadcast %350 : vector<2x1x14xf32> to vector<2x16x14xf32>
    %354 = vector.broadcast %352 : vector<1x16x1xf32> to vector<2x16x14xf32>
    %355 = arith.mulf %353, %354 : vector<2x16x14xf32>
    %356 = arith.addf %348, %355 : vector<2x16x14xf32>
    %357 = vector.shape_cast %339 : vector<16x1xf32> to vector<1x16x1xf32>
    %358 = vector.broadcast %357 : vector<1x16x1xf32> to vector<2x16x14xf32>
    %359 = arith.addf %356, %358 : vector<2x16x14xf32>
    %cst_115 = arith.constant 0.000000e+00 : f32
    %360 = vector.broadcast %cst_115 : f32 to vector<2x16x14xf32>
    %361 = arith.maximumf %359, %360 : vector<2x16x14xf32>
    %c0_116 = arith.constant 0 : index
    %c0_117 = arith.constant 0 : index
    %c179 = arith.constant 179 : index
    %362 = vector.load %arg8[%c0_116, %c0_117, %c179] : memref<2x16x256xf32, #tpu.memory_space<vmem>>, vector<2x16x14xf32>
    tpu.vector_store %arg8[%c0_116, %c0_117, %c179], %361 {strides = array<i32>} : memref<2x16x256xf32, #tpu.memory_space<vmem>>, vector<2x16x14xf32>,
    %c0_118 = arith.constant 0 : index
    %c0_119 = arith.constant 0 : index
    %363 = vector.load %arg6[%c0_118, %c0_119] : memref<16x2xf32, #tpu.memory_space<vmem>>, vector<16x2xf32>
    %c0_120 = arith.constant 0 : index
    %c0_121 = arith.constant 0 : index
    %364 = vector.load %arg7[%c0_120, %c0_121] : memref<16x1xf32, #tpu.memory_space<vmem>>, vector<16x1xf32>
    %cst_122 = arith.constant 0.000000e+00 : f32
    %365 = vector.broadcast %cst_122 : f32 to vector<2x16x12xf32>
    %366 = vector.extract_strided_slice %312 {offsets = [0, 0], sizes = [2, 12], strides = [1, 1]} : vector<2x16xf32> to vector<2x12xf32>
    %367 = vector.shape_cast %366 : vector<2x12xf32> to vector<2x1x12xf32>
    %368 = vector.extract_strided_slice %363 {offsets = [0, 0], sizes = [16, 1], strides = [1, 1]} : vector<16x2xf32> to vector<16x1xf32>
    %369 = vector.shape_cast %368 : vector<16x1xf32> to vector<1x16x1xf32>
    %370 = vector.broadcast %367 : vector<2x1x12xf32> to vector<2x16x12xf32>
    %371 = vector.broadcast %369 : vector<1x16x1xf32> to vector<2x16x12xf32>
    %372 = arith.mulf %370, %371 : vector<2x16x12xf32>
    %373 = arith.addf %365, %372 : vector<2x16x12xf32>
    %374 = vector.extract_strided_slice %312 {offsets = [0, 4], sizes = [2, 12], strides = [1, 1]} : vector<2x16xf32> to vector<2x12xf32>
    %375 = vector.shape_cast %374 : vector<2x12xf32> to vector<2x1x12xf32>
    %376 = vector.extract_strided_slice %363 {offsets = [0, 1], sizes = [16, 1], strides = [1, 1]} : vector<16x2xf32> to vector<16x1xf32>
    %377 = vector.shape_cast %376 : vector<16x1xf32> to vector<1x16x1xf32>
    %378 = vector.broadcast %375 : vector<2x1x12xf32> to vector<2x16x12xf32>
    %379 = vector.broadcast %377 : vector<1x16x1xf32> to vector<2x16x12xf32>
    %380 = arith.mulf %378, %379 : vector<2x16x12xf32>
    %381 = arith.addf %373, %380 : vector<2x16x12xf32>
    %382 = vector.shape_cast %364 : vector<16x1xf32> to vector<1x16x1xf32>
    %383 = vector.broadcast %382 : vector<1x16x1xf32> to vector<2x16x12xf32>
    %384 = arith.addf %381, %383 : vector<2x16x12xf32>
    %cst_123 = arith.constant 0.000000e+00 : f32
    %385 = vector.broadcast %cst_123 : f32 to vector<2x16x12xf32>
    %386 = arith.maximumf %384, %385 : vector<2x16x12xf32>
    %c0_124 = arith.constant 0 : index
    %c0_125 = arith.constant 0 : index
    %c193 = arith.constant 193 : index
    %387 = vector.load %arg8[%c0_124, %c0_125, %c193] : memref<2x16x256xf32, #tpu.memory_space<vmem>>, vector<2x16x12xf32>
    tpu.vector_store %arg8[%c0_124, %c0_125, %c193], %386 {strides = array<i32>} : memref<2x16x256xf32, #tpu.memory_space<vmem>>, vector<2x16x12xf32>,
    %388 = vector.extract_strided_slice %2 {offsets = [0, 5, 0], sizes = [2, 1, 16], strides = [1, 1, 1]} : vector<2x6x16xf32> to vector<2x1x16xf32>
    %389 = vector.shape_cast %388 : vector<2x1x16xf32> to vector<2x16xf32>
    %c0_126 = arith.constant 0 : index
    %c0_127 = arith.constant 0 : index
    %390 = vector.load %arg2[%c0_126, %c0_127] : memref<16x2xf32, #tpu.memory_space<vmem>>, vector<16x2xf32>
    %c0_128 = arith.constant 0 : index
    %c0_129 = arith.constant 0 : index
    %391 = vector.load %arg3[%c0_128, %c0_129] : memref<16x1xf32, #tpu.memory_space<vmem>>, vector<16x1xf32>
    %cst_130 = arith.constant 0.000000e+00 : f32
    %392 = vector.broadcast %cst_130 : f32 to vector<2x16x15xf32>
    %393 = vector.extract_strided_slice %389 {offsets = [0, 0], sizes = [2, 15], strides = [1, 1]} : vector<2x16xf32> to vector<2x15xf32>
    %394 = vector.shape_cast %393 : vector<2x15xf32> to vector<2x1x15xf32>
    %395 = vector.extract_strided_slice %390 {offsets = [0, 0], sizes = [16, 1], strides = [1, 1]} : vector<16x2xf32> to vector<16x1xf32>
    %396 = vector.shape_cast %395 : vector<16x1xf32> to vector<1x16x1xf32>
    %397 = vector.broadcast %394 : vector<2x1x15xf32> to vector<2x16x15xf32>
    %398 = vector.broadcast %396 : vector<1x16x1xf32> to vector<2x16x15xf32>
    %399 = arith.mulf %397, %398 : vector<2x16x15xf32>
    %400 = arith.addf %392, %399 : vector<2x16x15xf32>
    %401 = vector.extract_strided_slice %389 {offsets = [0, 1], sizes = [2, 15], strides = [1, 1]} : vector<2x16xf32> to vector<2x15xf32>
    %402 = vector.shape_cast %401 : vector<2x15xf32> to vector<2x1x15xf32>
    %403 = vector.extract_strided_slice %390 {offsets = [0, 1], sizes = [16, 1], strides = [1, 1]} : vector<16x2xf32> to vector<16x1xf32>
    %404 = vector.shape_cast %403 : vector<16x1xf32> to vector<1x16x1xf32>
    %405 = vector.broadcast %402 : vector<2x1x15xf32> to vector<2x16x15xf32>
    %406 = vector.broadcast %404 : vector<1x16x1xf32> to vector<2x16x15xf32>
    %407 = arith.mulf %405, %406 : vector<2x16x15xf32>
    %408 = arith.addf %400, %407 : vector<2x16x15xf32>
    %409 = vector.shape_cast %391 : vector<16x1xf32> to vector<1x16x1xf32>
    %410 = vector.broadcast %409 : vector<1x16x1xf32> to vector<2x16x15xf32>
    %411 = arith.addf %408, %410 : vector<2x16x15xf32>
    %cst_131 = arith.constant 0.000000e+00 : f32
    %412 = vector.broadcast %cst_131 : f32 to vector<2x16x15xf32>
    %413 = arith.maximumf %411, %412 : vector<2x16x15xf32>
    %c0_132 = arith.constant 0 : index
    %c0_133 = arith.constant 0 : index
    %c205 = arith.constant 205 : index
    %414 = vector.load %arg8[%c0_132, %c0_133, %c205] : memref<2x16x256xf32, #tpu.memory_space<vmem>>, vector<2x16x15xf32>
    tpu.vector_store %arg8[%c0_132, %c0_133, %c205], %413 {strides = array<i32>} : memref<2x16x256xf32, #tpu.memory_space<vmem>>, vector<2x16x15xf32>,
    %c0_134 = arith.constant 0 : index
    %c0_135 = arith.constant 0 : index
    %415 = vector.load %arg4[%c0_134, %c0_135] : memref<16x2xf32, #tpu.memory_space<vmem>>, vector<16x2xf32>
    %c0_136 = arith.constant 0 : index
    %c0_137 = arith.constant 0 : index
    %416 = vector.load %arg5[%c0_136, %c0_137] : memref<16x1xf32, #tpu.memory_space<vmem>>, vector<16x1xf32>
    %cst_138 = arith.constant 0.000000e+00 : f32
    %417 = vector.broadcast %cst_138 : f32 to vector<2x16x14xf32>
    %418 = vector.extract_strided_slice %389 {offsets = [0, 0], sizes = [2, 14], strides = [1, 1]} : vector<2x16xf32> to vector<2x14xf32>
    %419 = vector.shape_cast %418 : vector<2x14xf32> to vector<2x1x14xf32>
    %420 = vector.extract_strided_slice %415 {offsets = [0, 0], sizes = [16, 1], strides = [1, 1]} : vector<16x2xf32> to vector<16x1xf32>
    %421 = vector.shape_cast %420 : vector<16x1xf32> to vector<1x16x1xf32>
    %422 = vector.broadcast %419 : vector<2x1x14xf32> to vector<2x16x14xf32>
    %423 = vector.broadcast %421 : vector<1x16x1xf32> to vector<2x16x14xf32>
    %424 = arith.mulf %422, %423 : vector<2x16x14xf32>
    %425 = arith.addf %417, %424 : vector<2x16x14xf32>
    %426 = vector.extract_strided_slice %389 {offsets = [0, 2], sizes = [2, 14], strides = [1, 1]} : vector<2x16xf32> to vector<2x14xf32>
    %427 = vector.shape_cast %426 : vector<2x14xf32> to vector<2x1x14xf32>
    %428 = vector.extract_strided_slice %415 {offsets = [0, 1], sizes = [16, 1], strides = [1, 1]} : vector<16x2xf32> to vector<16x1xf32>
    %429 = vector.shape_cast %428 : vector<16x1xf32> to vector<1x16x1xf32>
    %430 = vector.broadcast %427 : vector<2x1x14xf32> to vector<2x16x14xf32>
    %431 = vector.broadcast %429 : vector<1x16x1xf32> to vector<2x16x14xf32>
    %432 = arith.mulf %430, %431 : vector<2x16x14xf32>
    %433 = arith.addf %425, %432 : vector<2x16x14xf32>
    %434 = vector.shape_cast %416 : vector<16x1xf32> to vector<1x16x1xf32>
    %435 = vector.broadcast %434 : vector<1x16x1xf32> to vector<2x16x14xf32>
    %436 = arith.addf %433, %435 : vector<2x16x14xf32>
    %cst_139 = arith.constant 0.000000e+00 : f32
    %437 = vector.broadcast %cst_139 : f32 to vector<2x16x14xf32>
    %438 = arith.maximumf %436, %437 : vector<2x16x14xf32>
    %c0_140 = arith.constant 0 : index
    %c0_141 = arith.constant 0 : index
    %c220 = arith.constant 220 : index
    %439 = vector.load %arg8[%c0_140, %c0_141, %c220] : memref<2x16x256xf32, #tpu.memory_space<vmem>>, vector<2x16x14xf32>
    tpu.vector_store %arg8[%c0_140, %c0_141, %c220], %438 {strides = array<i32>} : memref<2x16x256xf32, #tpu.memory_space<vmem>>, vector<2x16x14xf32>,
    %c0_142 = arith.constant 0 : index
    %c0_143 = arith.constant 0 : index
    %440 = vector.load %arg6[%c0_142, %c0_143] : memref<16x2xf32, #tpu.memory_space<vmem>>, vector<16x2xf32>
    %c0_144 = arith.constant 0 : index
    %c0_145 = arith.constant 0 : index
    %441 = vector.load %arg7[%c0_144, %c0_145] : memref<16x1xf32, #tpu.memory_space<vmem>>, vector<16x1xf32>
    %cst_146 = arith.constant 0.000000e+00 : f32
    %442 = vector.broadcast %cst_146 : f32 to vector<2x16x12xf32>
    %443 = vector.extract_strided_slice %389 {offsets = [0, 0], sizes = [2, 12], strides = [1, 1]} : vector<2x16xf32> to vector<2x12xf32>
    %444 = vector.shape_cast %443 : vector<2x12xf32> to vector<2x1x12xf32>
    %445 = vector.extract_strided_slice %440 {offsets = [0, 0], sizes = [16, 1], strides = [1, 1]} : vector<16x2xf32> to vector<16x1xf32>
    %446 = vector.shape_cast %445 : vector<16x1xf32> to vector<1x16x1xf32>
    %447 = vector.broadcast %444 : vector<2x1x12xf32> to vector<2x16x12xf32>
    %448 = vector.broadcast %446 : vector<1x16x1xf32> to vector<2x16x12xf32>
    %449 = arith.mulf %447, %448 : vector<2x16x12xf32>
    %450 = arith.addf %442, %449 : vector<2x16x12xf32>
    %451 = vector.extract_strided_slice %389 {offsets = [0, 4], sizes = [2, 12], strides = [1, 1]} : vector<2x16xf32> to vector<2x12xf32>
    %452 = vector.shape_cast %451 : vector<2x12xf32> to vector<2x1x12xf32>
    %453 = vector.extract_strided_slice %440 {offsets = [0, 1], sizes = [16, 1], strides = [1, 1]} : vector<16x2xf32> to vector<16x1xf32>
    %454 = vector.shape_cast %453 : vector<16x1xf32> to vector<1x16x1xf32>
    %455 = vector.broadcast %452 : vector<2x1x12xf32> to vector<2x16x12xf32>
    %456 = vector.broadcast %454 : vector<1x16x1xf32> to vector<2x16x12xf32>
    %457 = arith.mulf %455, %456 : vector<2x16x12xf32>
    %458 = arith.addf %450, %457 : vector<2x16x12xf32>
    %459 = vector.shape_cast %441 : vector<16x1xf32> to vector<1x16x1xf32>
    %460 = vector.broadcast %459 : vector<1x16x1xf32> to vector<2x16x12xf32>
    %461 = arith.addf %458, %460 : vector<2x16x12xf32>
    %cst_147 = arith.constant 0.000000e+00 : f32
    %462 = vector.broadcast %cst_147 : f32 to vector<2x16x12xf32>
    %463 = arith.maximumf %461, %462 : vector<2x16x12xf32>
    %c0_148 = arith.constant 0 : index
    %c0_149 = arith.constant 0 : index
    %c234 = arith.constant 234 : index
    %464 = vector.load %arg8[%c0_148, %c0_149, %c234] : memref<2x16x256xf32, #tpu.memory_space<vmem>>, vector<2x16x12xf32>
    tpu.vector_store %arg8[%c0_148, %c0_149, %c234], %463 {strides = array<i32>} : memref<2x16x256xf32, #tpu.memory_space<vmem>>, vector<2x16x12xf32>,
    return
  }
  func.func @transform_0(%arg0: i32) -> (i32, i32, i32) {
    %c0_i32 = arith.constant 0 : i32
    %c0_i32_0 = arith.constant 0 : i32
    %c0_i32_1 = arith.constant 0 : i32
    %c0_i32_2 = arith.constant 0 : i32
    return %c0_i32, %c0_i32_0, %c0_i32_1 : i32, i32, i32
  }
  func.func @transform_1(%arg0: i32) -> (i32, i32) {
    %c0_i32 = arith.constant 0 : i32
    %c0_i32_0 = arith.constant 0 : i32
    %c0_i32_1 = arith.constant 0 : i32
    return %c0_i32, %c0_i32_0 : i32, i32
  }
  func.func @transform_2(%arg0: i32) -> (i32, i32) {
    %c0_i32 = arith.constant 0 : i32
    %c0_i32_0 = arith.constant 0 : i32
    %c0_i32_1 = arith.constant 0 : i32
    return %c0_i32, %c0_i32_0 : i32, i32
  }
  func.func @transform_3(%arg0: i32) -> (i32, i32) {
    %c0_i32 = arith.constant 0 : i32
    %c0_i32_0 = arith.constant 0 : i32
    %c0_i32_1 = arith.constant 0 : i32
    return %c0_i32, %c0_i32_0 : i32, i32
  }
  func.func @transform_4(%arg0: i32) -> (i32, i32) {
    %c0_i32 = arith.constant 0 : i32
    %c0_i32_0 = arith.constant 0 : i32
    %c0_i32_1 = arith.constant 0 : i32
    return %c0_i32, %c0_i32_0 : i32, i32
  }
  func.func @transform_5(%arg0: i32) -> (i32, i32) {
    %c0_i32 = arith.constant 0 : i32
    %c0_i32_0 = arith.constant 0 : i32
    %c0_i32_1 = arith.constant 0 : i32
    return %c0_i32, %c0_i32_0 : i32, i32
  }
  func.func @transform_6(%arg0: i32) -> (i32, i32) {
    %c0_i32 = arith.constant 0 : i32
    %c0_i32_0 = arith.constant 0 : i32
    %c0_i32_1 = arith.constant 0 : i32
    return %c0_i32, %c0_i32_0 : i32, i32
  }
  func.func @transform_7(%arg0: i32) -> (i32, i32, i32) {
    %c0_i32 = arith.constant 0 : i32
    %c0_i32_0 = arith.constant 0 : i32
    %c0_i32_1 = arith.constant 0 : i32
    %c0_i32_2 = arith.constant 0 : i32
    return %c0_i32, %c0_i32_0, %c0_i32_1 : i32, i32, i32
  }
}

</mosaic_0001>

<llo_original>
// kernel: tpu_custom_call.1
$region0: #{tpu_custom_call.1}
  #allocation0 [shape = 'u32[]', space=smem, size = 0x4, offset = 0x4, fixed_abs, tag = 'smem constant byte address 0x4 - core index']
  #allocation1 [shape = 'u32[144,128]{1,0:T(1,128)}', space=vmem, size = 0x12000, scoped, tag = 'internal scratch']
  %s0 = inlined_call_operand.vmem [shape: f32[2,6,16], index: 0, kind: input, shape index: {}]
  %s1 = inlined_call_operand.vmem [shape: f32[16,2], index: 1, kind: input, shape index: {}]
  %s2 = inlined_call_operand.vmem [shape: f32[16,1], index: 2, kind: input, shape index: {}]
  %s3 = inlined_call_operand.vmem [shape: f32[16,2], index: 3, kind: input, shape index: {}]
  %s4 = inlined_call_operand.vmem [shape: f32[16,1], index: 4, kind: input, shape index: {}]
  %s5 = inlined_call_operand.vmem [shape: f32[16,2], index: 5, kind: input, shape index: {}]
  %s6 = inlined_call_operand.vmem [shape: f32[16,1], index: 6, kind: input, shape index: {}]
  %s7 = inlined_call_operand.hbm [shape: f32[2,16,256], index: 7, kind: output, shape index: {}]
  %s8 = sld [smem:[#allocation0]]
  $region38: #{tpu_custom_call.1} parent=0
    _
  %s10 = ssub.s32 1, %s8
  %s11 = scalar_select 0, %s10, %s8
  $region1: #{tpu_custom_call.1} parent=0
    #allocation2 [shape = 'u8[32768]{0}', space=vmem, size = 0x8000, scoped, tag = 'output window, operand 0, single buffered']
    #allocation3 [shape = 's32[1]{0}', space=sflag, size = 0x4, scoped, tag = 'scoped memory for tpu_custom_call.1']
    %12 = vsyncpa [#allocation3], 0
    // Predicated region
    $region2: #{tpu_custom_call.1} parent=1 // pred_check
      _
    $region3: #{tpu_custom_call.1} parent=1 // pred_check_branch
      %14 = sbr.rel (0) target = $region5
    $region4: #{tpu_custom_call.1} parent=1 // pred_region
      _
    $region5: #{tpu_custom_call.1} parent=1 // pred_fallthru
      _
    // Predicated region
    $region6: #{tpu_custom_call.1} parent=1 // pred_check
      _
    $region7: #{tpu_custom_call.1} parent=1 // pred_check_branch
      %16 = sbr.rel (0) target = $region9
    $region8: #{tpu_custom_call.1} parent=1 // pred_region
      _
    $region9: #{tpu_custom_call.1} parent=1 // pred_fallthru
      _
    // Predicated region
    $region10: #{tpu_custom_call.1} parent=1 // pred_check
      _
    $region11: #{tpu_custom_call.1} parent=1 // pred_check_branch
      %18 = sbr.rel (0) target = $region13
    $region12: #{tpu_custom_call.1} parent=1 // pred_region
      _
    $region13: #{tpu_custom_call.1} parent=1 // pred_fallthru
      _
    // Predicated region
    $region14: #{tpu_custom_call.1} parent=1 // pred_check
      _
    $region15: #{tpu_custom_call.1} parent=1 // pred_check_branch
      %20 = sbr.rel (0) target = $region17
    $region16: #{tpu_custom_call.1} parent=1 // pred_region
      _
    $region17: #{tpu_custom_call.1} parent=1 // pred_fallthru
      _
    // Predicated region
    $region18: #{tpu_custom_call.1} parent=1 // pred_check
      _
    $region19: #{tpu_custom_call.1} parent=1 // pred_check_branch
      %22 = sbr.rel (0) target = $region21
    $region20: #{tpu_custom_call.1} parent=1 // pred_region
      _
    $region21: #{tpu_custom_call.1} parent=1 // pred_fallthru
      _
    // Predicated region
    $region22: #{tpu_custom_call.1} parent=1 // pred_check
      _
    $region23: #{tpu_custom_call.1} parent=1 // pred_check_branch
      %24 = sbr.rel (0) target = $region25
    $region24: #{tpu_custom_call.1} parent=1 // pred_region
      _
    $region25: #{tpu_custom_call.1} parent=1 // pred_fallthru
      _
    // Predicated region
    $region26: #{tpu_custom_call.1} parent=1 // pred_check
      _
    $region27: #{tpu_custom_call.1} parent=1 // pred_check_branch
      %26 = sbr.rel (0) target = $region29
    $region28: #{tpu_custom_call.1} parent=1 // pred_region
      _
    $region29: #{tpu_custom_call.1} parent=1 // pred_fallthru
      _
    %27 = vst [vmem:[#allocation2] sm:$0xff] 0.0
    %28 = vst [vmem:[#allocation2 + $0x8] sm:$0xff] 0.0
    %29 = vst [vmem:[#allocation2 + $0x10] sm:$0xff] 0.0
    %30 = vst [vmem:[#allocation2 + $0x18] sm:$0xff] 0.0
    %31 = vst [vmem:[#allocation2 + $0x20] sm:$0xff] 0.0
    %32 = vst [vmem:[#allocation2 + $0x28] sm:$0xff] 0.0
    %33 = vst [vmem:[#allocation2 + $0x30] sm:$0xff] 0.0
    %34 = vst [vmem:[#allocation2 + $0x38] sm:$0xff] 0.0
    %v35 = vld [vmem:[%s0] sm:$0x3f]
    %v36 = vld [vmem:[%s0 + $0x8] sm:$0x3f]
    %v37 = vld [vmem:[%s1] sm:$0xff]
    %v38 = vld [vmem:[%s1 + $0x8] sm:$0xff]
    %v39 = vld [vmem:[%s2] sm:$0xff]
    %v40 = vld [vmem:[%s2 + $0x8] sm:$0xff]
    %v41 = vlaneseq
    %v42 = vshrl.u32 %v41, 7
    %v43 = vsub.s32 0, %v42
    %v44 = vrot.slane %v35, %v43
    %v45 = vlaneseq
    %v46 = vshrl.u32 %v45, 7
    %v47 = vsub.s32 0, %v46
    %v48 = vrot.slane %v36, %v47
    %50 = vset.pattern.permute.xlu0 0
    %51 = vperm.xlu0 %50, %v37
    %v52 = vpop.permute.xlu0 %51
    %55 = vset.pattern.permute.xlu0 0
    %56 = vperm.xlu0 %55, %v38
    %v57 = vpop.permute.xlu0 %56
    %v59 = vmul.f32 %v44, %v52
    %v60 = vmul.f32 %v44, %v57
    %v61 = vmul.f32 %v48, %v52
    %v62 = vmul.f32 %v48, %v57
    %v63 = vadd.f32 %v59, 0.0
    %v64 = vadd.f32 %v60, 0.0
    %v65 = vadd.f32 %v61, 0.0
    %v66 = vadd.f32 %v62, 0.0
    %67 = vset.pattern.permute.xlu0 1
    %68 = vperm.xlu0 %67, %v37
    %v69 = vpop.permute.xlu0 %68
    %71 = vset.pattern.permute.xlu0 1
    %72 = vperm.xlu0 %71, %v38
    %v73 = vpop.permute.xlu0 %72
    %v75 = vmul.f32 %v44, %v69
    %v76 = vmul.f32 %v44, %v73
    %v77 = vmul.f32 %v48, %v69
    %v78 = vmul.f32 %v48, %v73
    %83 = vrot.lane.b32.xlu0 %v75, 127
    %v84 = vpop.permute.xlu0 %83
    %85 = vrot.lane.b32.xlu0 %v76, 127
    %v86 = vpop.permute.xlu0 %85
    %87 = vrot.lane.b32.xlu0 %v77, 127
    %v88 = vpop.permute.xlu0 %87
    %89 = vrot.lane.b32.xlu0 %v78, 127
    %v90 = vpop.permute.xlu0 %89
    %v95 = vadd.f32 %v63, %v84
    %v96 = vadd.f32 %v64, %v86
    %v97 = vadd.f32 %v65, %v88
    %v98 = vadd.f32 %v66, %v90
    %100 = vset.pattern.permute.xlu0 0
    %101 = vperm.xlu0 %100, %v39
    %v102 = vpop.permute.xlu0 %101
    %105 = vset.pattern.permute.xlu0 0
    %106 = vperm.xlu0 %105, %v40
    %v107 = vpop.permute.xlu0 %106
    %v109 = vadd.f32 %v95, %v102
    %v110 = vadd.f32 %v96, %v107
    %v111 = vadd.f32 %v97, %v102
    %v112 = vadd.f32 %v98, %v107
    %v113 = vmax.f32 %v109, 0.0
    %v114 = vmax.f32 %v110, 0.0
    %v115 = vmax.f32 %v111, 0.0
    %v116 = vmax.f32 %v112, 0.0
    %vm117 = vcmask 121856
    %118 = vst.msk [vmem:[#allocation2] sm:$0xff] %vm117, %v113
    %119 = vst.msk [vmem:[#allocation2 + $0x10] sm:$0xff] %vm117, %v114
    %120 = vst.msk [vmem:[#allocation2 + $0x20] sm:$0xff] %vm117, %v115
    %121 = vst.msk [vmem:[#allocation2 + $0x30] sm:$0xff] %vm117, %v116
    %v122 = vld [vmem:[%s3] sm:$0xff]
    %v123 = vld [vmem:[%s3 + $0x8] sm:$0xff]
    %v124 = vld [vmem:[%s4] sm:$0xff]
    %v125 = vld [vmem:[%s4 + $0x8] sm:$0xff]
    %127 = vset.pattern.permute.xlu0 0
    %128 = vperm.xlu0 %127, %v122
    %v129 = vpop.permute.xlu0 %128
    %132 = vset.pattern.permute.xlu0 0
    %133 = vperm.xlu0 %132, %v123
    %v134 = vpop.permute.xlu0 %133
    %v136 = vmul.f32 %v44, %v129
    %v137 = vmul.f32 %v44, %v134
    %v138 = vmul.f32 %v48, %v129
    %v139 = vmul.f32 %v48, %v134
    %v140 = vadd.f32 %v136, 0.0
    %v141 = vadd.f32 %v137, 0.0
    %v142 = vadd.f32 %v138, 0.0
    %v143 = vadd.f32 %v139, 0.0
    %144 = vset.pattern.permute.xlu0 1
    %145 = vperm.xlu0 %144, %v122
    %v146 = vpop.permute.xlu0 %145
    %148 = vset.pattern.permute.xlu0 1
    %149 = vperm.xlu0 %148, %v123
    %v150 = vpop.permute.xlu0 %149
    %v152 = vmul.f32 %v44, %v146
    %v153 = vmul.f32 %v44, %v150
    %v154 = vmul.f32 %v48, %v146
    %v155 = vmul.f32 %v48, %v150
    %160 = vrot.lane.b32.xlu0 %v152, 126
    %v161 = vpop.permute.xlu0 %160
    %162 = vrot.lane.b32.xlu0 %v153, 126
    %v163 = vpop.permute.xlu0 %162
    %164 = vrot.lane.b32.xlu0 %v154, 126
    %v165 = vpop.permute.xlu0 %164
    %166 = vrot.lane.b32.xlu0 %v155, 126
    %v167 = vpop.permute.xlu0 %166
    %v172 = vadd.f32 %v140, %v161
    %v173 = vadd.f32 %v141, %v163
    %v174 = vadd.f32 %v142, %v165
    %v175 = vadd.f32 %v143, %v167
    %177 = vset.pattern.permute.xlu0 0
    %178 = vperm.xlu0 %177, %v124
    %v179 = vpop.permute.xlu0 %178
    %182 = vset.pattern.permute.xlu0 0
    %183 = vperm.xlu0 %182, %v125
    %v184 = vpop.permute.xlu0 %183
    %v186 = vadd.f32 %v172, %v179
    %v187 = vadd.f32 %v173, %v184
    %v188 = vadd.f32 %v174, %v179
    %v189 = vadd.f32 %v175, %v184
    %v190 = vmax.f32 %v186, 0.0
    %v191 = vmax.f32 %v187, 0.0
    %v192 = vmax.f32 %v188, 0.0
    %v193 = vmax.f32 %v189, 0.0
    %198 = vrot.lane.b32.xlu0 %v190, 15
    %v199 = vpop.permute.xlu0 %198
    %200 = vrot.lane.b32.xlu0 %v191, 15
    %v201 = vpop.permute.xlu0 %200
    %202 = vrot.lane.b32.xlu0 %v192, 15
    %v203 = vpop.permute.xlu0 %202
    %204 = vrot.lane.b32.xlu0 %v193, 15
    %v205 = vpop.permute.xlu0 %204
    %vm210 = vcmask 236664
    %211 = vst.msk [vmem:[#allocation2] sm:$0xff] %vm210, %v199
    %212 = vst.msk [vmem:[#allocation2 + $0x10] sm:$0xff] %vm210, %v201
    %213 = vst.msk [vmem:[#allocation2 + $0x20] sm:$0xff] %vm210, %v203
    %214 = vst.msk [vmem:[#allocation2 + $0x30] sm:$0xff] %vm210, %v205
    %v215 = vld [vmem:[%s5] sm:$0xff]
    %v216 = vld [vmem:[%s5 + $0x8] sm:$0xff]
    %v217 = vld [vmem:[%s6] sm:$0xff]
    %v218 = vld [vmem:[%s6 + $0x8] sm:$0xff]
    %220 = vset.pattern.permute.xlu0 0
    %221 = vperm.xlu0 %220, %v215
    %v222 = vpop.permute.xlu0 %221
    %225 = vset.pattern.permute.xlu0 0
    %226 = vperm.xlu0 %225, %v216
    %v227 = vpop.permute.xlu0 %226
    %v229 = vmul.f32 %v44, %v222
    %v230 = vmul.f32 %v44, %v227
    %v231 = vmul.f32 %v48, %v222
    %v232 = vmul.f32 %v48, %v227
    %v233 = vadd.f32 %v229, 0.0
    %v234 = vadd.f32 %v230, 0.0
    %v235 = vadd.f32 %v231, 0.0
    %v236 = vadd.f32 %v232, 0.0
    %237 = vset.pattern.permute.xlu0 1
    %238 = vperm.xlu0 %237, %v215
    %v239 = vpop.permute.xlu0 %238
    %241 = vset.pattern.permute.xlu0 1
    %242 = vperm.xlu0 %241, %v216
    %v243 = vpop.permute.xlu0 %242
    %v245 = vmul.f32 %v44, %v239
    %v246 = vmul.f32 %v44, %v243
    %v247 = vmul.f32 %v48, %v239
    %v248 = vmul.f32 %v48, %v243
    %253 = vrot.lane.b32.xlu0 %v245, 124
    %v254 = vpop.permute.xlu0 %253
    %255 = vrot.lane.b32.xlu0 %v246, 124
    %v256 = vpop.permute.xlu0 %255
    %257 = vrot.lane.b32.xlu0 %v247, 124
    %v258 = vpop.permute.xlu0 %257
    %259 = vrot.lane.b32.xlu0 %v248, 124
    %v260 = vpop.permute.xlu0 %259
    %v265 = vadd.f32 %v233, %v254
    %v266 = vadd.f32 %v234, %v256
    %v267 = vadd.f32 %v235, %v258
    %v268 = vadd.f32 %v236, %v260
    %270 = vset.pattern.permute.xlu0 0
    %271 = vperm.xlu0 %270, %v217
    %v272 = vpop.permute.xlu0 %271
    %275 = vset.pattern.permute.xlu0 0
    %276 = vperm.xlu0 %275, %v218
    %v277 = vpop.permute.xlu0 %276
    %v279 = vadd.f32 %v265, %v272
    %v280 = vadd.f32 %v266, %v277
    %v281 = vadd.f32 %v267, %v272
    %v282 = vadd.f32 %v268, %v277
    %v283 = vmax.f32 %v279, 0.0
    %v284 = vmax.f32 %v280, 0.0
    %v285 = vmax.f32 %v281, 0.0
    %v286 = vmax.f32 %v282, 0.0
    %291 = vrot.lane.b32.xlu0 %v283, 29
    %v292 = vpop.permute.xlu0 %291
    %293 = vrot.lane.b32.xlu0 %v284, 29
    %v294 = vpop.permute.xlu0 %293
    %295 = vrot.lane.b32.xlu0 %v285, 29
    %v296 = vpop.permute.xlu0 %295
    %297 = vrot.lane.b32.xlu0 %v286, 29
    %v298 = vpop.permute.xlu0 %297
    %vm303 = vcmask 335080
    %304 = vst.msk [vmem:[#allocation2] sm:$0xff] %vm303, %v292
    %305 = vst.msk [vmem:[#allocation2 + $0x10] sm:$0xff] %vm303, %v294
    %306 = vst.msk [vmem:[#allocation2 + $0x20] sm:$0xff] %vm303, %v296
    %307 = vst.msk [vmem:[#allocation2 + $0x30] sm:$0xff] %vm303, %v298
    %v308 = vld [vmem:[%s1] sm:$0xff]
    %v309 = vld [vmem:[%s1 + $0x8] sm:$0xff]
    %v310 = vld [vmem:[%s2] sm:$0xff]
    %v311 = vld [vmem:[%s2 + $0x8] sm:$0xff]
    %v312 = vlaneseq
    %v313 = vshrl.u32 %v312, 7
    %v314 = vsub.s32 1, %v313
    %v315 = vrot.slane %v35, %v314
    %v316 = vlaneseq
    %v317 = vshrl.u32 %v316, 7
    %v318 = vsub.s32 1, %v317
    %v319 = vrot.slane %v36, %v318
    %321 = vset.pattern.permute.xlu0 0
    %322 = vperm.xlu0 %321, %v308
    %v323 = vpop.permute.xlu0 %322
    %326 = vset.pattern.permute.xlu0 0
    %327 = vperm.xlu0 %326, %v309
    %v328 = vpop.permute.xlu0 %327
    %v330 = vmul.f32 %v315, %v323
    %v331 = vmul.f32 %v315, %v328
    %v332 = vmul.f32 %v319, %v323
    %v333 = vmul.f32 %v319, %v328
    %v334 = vadd.f32 %v330, 0.0
    %v335 = vadd.f32 %v331, 0.0
    %v336 = vadd.f32 %v332, 0.0
    %v337 = vadd.f32 %v333, 0.0
    %338 = vset.pattern.permute.xlu0 1
    %339 = vperm.xlu0 %338, %v308
    %v340 = vpop.permute.xlu0 %339
    %342 = vset.pattern.permute.xlu0 1
    %343 = vperm.xlu0 %342, %v309
    %v344 = vpop.permute.xlu0 %343
    %v346 = vmul.f32 %v315, %v340
    %v347 = vmul.f32 %v315, %v344
    %v348 = vmul.f32 %v319, %v340
    %v349 = vmul.f32 %v319, %v344
    %354 = vrot.lane.b32.xlu0 %v346, 127
    %v355 = vpop.permute.xlu0 %354
    %356 = vrot.lane.b32.xlu0 %v347, 127
    %v357 = vpop.permute.xlu0 %356
    %358 = vrot.lane.b32.xlu0 %v348, 127
    %v359 = vpop.permute.xlu0 %358
    %360 = vrot.lane.b32.xlu0 %v349, 127
    %v361 = vpop.permute.xlu0 %360
    %v366 = vadd.f32 %v334, %v355
    %v367 = vadd.f32 %v335, %v357
    %v368 = vadd.f32 %v336, %v359
    %v369 = vadd.f32 %v337, %v361
    %371 = vset.pattern.permute.xlu0 0
    %372 = vperm.xlu0 %371, %v310
    %v373 = vpop.permute.xlu0 %372
    %376 = vset.pattern.permute.xlu0 0
    %377 = vperm.xlu0 %376, %v311
    %v378 = vpop.permute.xlu0 %377
    %v380 = vadd.f32 %v366, %v373
    %v381 = vadd.f32 %v367, %v378
    %v382 = vadd.f32 %v368, %v373
    %v383 = vadd.f32 %v369, %v378
    %v384 = vmax.f32 %v380, 0.0
    %v385 = vmax.f32 %v381, 0.0
    %v386 = vmax.f32 %v382, 0.0
    %v387 = vmax.f32 %v383, 0.0
    %392 = vrot.lane.b32.xlu0 %v384, 41
    %v393 = vpop.permute.xlu0 %392
    %394 = vrot.lane.b32.xlu0 %v385, 41
    %v395 = vpop.permute.xlu0 %394
    %396 = vrot.lane.b32.xlu0 %v386, 41
    %v397 = vpop.permute.xlu0 %396
    %398 = vrot.lane.b32.xlu0 %v387, 41
    %v399 = vpop.permute.xlu0 %398
    %vm404 = vcmask 458056
    %405 = vst.msk [vmem:[#allocation2] sm:$0xff] %vm404, %v393
    %406 = vst.msk [vmem:[#allocation2 + $0x10] sm:$0xff] %vm404, %v395
    %407 = vst.msk [vmem:[#allocation2 + $0x20] sm:$0xff] %vm404, %v397
    %408 = vst.msk [vmem:[#allocation2 + $0x30] sm:$0xff] %vm404, %v399
    %v409 = vld [vmem:[%s3] sm:$0xff]
    %v410 = vld [vmem:[%s3 + $0x8] sm:$0xff]
    %v411 = vld [vmem:[%s4] sm:$0xff]
    %v412 = vld [vmem:[%s4 + $0x8] sm:$0xff]
    %414 = vset.pattern.permute.xlu0 0
    %415 = vperm.xlu0 %414, %v409
    %v416 = vpop.permute.xlu0 %415
    %419 = vset.pattern.permute.xlu0 0
    %420 = vperm.xlu0 %419, %v410
    %v421 = vpop.permute.xlu0 %420
    %v423 = vmul.f32 %v315, %v416
    %v424 = vmul.f32 %v315, %v421
    %v425 = vmul.f32 %v319, %v416
    %v426 = vmul.f32 %v319, %v421
    %v427 = vadd.f32 %v423, 0.0
    %v428 = vadd.f32 %v424, 0.0
    %v429 = vadd.f32 %v425, 0.0
    %v430 = vadd.f32 %v426, 0.0
    %431 = vset.pattern.permute.xlu0 1
    %432 = vperm.xlu0 %431, %v409
    %v433 = vpop.permute.xlu0 %432
    %435 = vset.pattern.permute.xlu0 1
    %436 = vperm.xlu0 %435, %v410
    %v437 = vpop.permute.xlu0 %436
    %v439 = vmul.f32 %v315, %v433
    %v440 = vmul.f32 %v315, %v437
    %v441 = vmul.f32 %v319, %v433
    %v442 = vmul.f32 %v319, %v437
    %447 = vrot.lane.b32.xlu0 %v439, 126
    %v448 = vpop.permute.xlu0 %447
    %449 = vrot.lane.b32.xlu0 %v440, 126
    %v450 = vpop.permute.xlu0 %449
    %451 = vrot.lane.b32.xlu0 %v441, 126
    %v452 = vpop.permute.xlu0 %451
    %453 = vrot.lane.b32.xlu0 %v442, 126
    %v454 = vpop.permute.xlu0 %453
    %v459 = vadd.f32 %v427, %v448
    %v460 = vadd.f32 %v428, %v450
    %v461 = vadd.f32 %v429, %v452
    %v462 = vadd.f32 %v430, %v454
    %464 = vset.pattern.permute.xlu0 0
    %465 = vperm.xlu0 %464, %v411
    %v466 = vpop.permute.xlu0 %465
    %469 = vset.pattern.permute.xlu0 0
    %470 = vperm.xlu0 %469, %v412
    %v471 = vpop.permute.xlu0 %470
    %v473 = vadd.f32 %v459, %v466
    %v474 = vadd.f32 %v460, %v471
    %v475 = vadd.f32 %v461, %v466
    %v476 = vadd.f32 %v462, %v471
    %v477 = vmax.f32 %v473, 0.0
    %v478 = vmax.f32 %v474, 0.0
    %v479 = vmax.f32 %v475, 0.0
    %v480 = vmax.f32 %v476, 0.0
    %485 = vrot.lane.b32.xlu0 %v477, 56
    %v486 = vpop.permute.xlu0 %485
    %487 = vrot.lane.b32.xlu0 %v478, 56
    %v488 = vpop.permute.xlu0 %487
    %489 = vrot.lane.b32.xlu0 %v479, 56
    %v490 = vpop.permute.xlu0 %489
    %491 = vrot.lane.b32.xlu0 %v480, 56
    %v492 = vpop.permute.xlu0 %491
    %vm497 = vcmask 572864
    %498 = vst.msk [vmem:[#allocation2] sm:$0xff] %vm497, %v486
    %499 = vst.msk [vmem:[#allocation2 + $0x10] sm:$0xff] %vm497, %v488
    %500 = vst.msk [vmem:[#allocation2 + $0x20] sm:$0xff] %vm497, %v490
    %501 = vst.msk [vmem:[#allocation2 + $0x30] sm:$0xff] %vm497, %v492
    %v502 = vld [vmem:[%s5] sm:$0xff]
    %v503 = vld [vmem:[%s5 + $0x8] sm:$0xff]
    %v504 = vld [vmem:[%s6] sm:$0xff]
    %v505 = vld [vmem:[%s6 + $0x8] sm:$0xff]
    %507 = vset.pattern.permute.xlu0 0
    %508 = vperm.xlu0 %507, %v502
    %v509 = vpop.permute.xlu0 %508
    %512 = vset.pattern.permute.xlu0 0
    %513 = vperm.xlu0 %512, %v503
    %v514 = vpop.permute.xlu0 %513
    %v516 = vmul.f32 %v315, %v509
    %v517 = vmul.f32 %v315, %v514
    %v518 = vmul.f32 %v319, %v509
    %v519 = vmul.f32 %v319, %v514
    %v520 = vadd.f32 %v516, 0.0
    %v521 = vadd.f32 %v517, 0.0
    %v522 = vadd.f32 %v518, 0.0
    %v523 = vadd.f32 %v519, 0.0
    %524 = vset.pattern.permute.xlu0 1
    %525 = vperm.xlu0 %524, %v502
    %v526 = vpop.permute.xlu0 %525
    %528 = vset.pattern.permute.xlu0 1
    %529 = vperm.xlu0 %528, %v503
    %v530 = vpop.permute.xlu0 %529
    %v532 = vmul.f32 %v315, %v526
    %v533 = vmul.f32 %v315, %v530
    %v534 = vmul.f32 %v319, %v526
    %v535 = vmul.f32 %v319, %v530
    %540 = vrot.lane.b32.xlu0 %v532, 124
    %v541 = vpop.permute.xlu0 %540
    %542 = vrot.lane.b32.xlu0 %v533, 124
    %v543 = vpop.permute.xlu0 %542
    %544 = vrot.lane.b32.xlu0 %v534, 124
    %v545 = vpop.permute.xlu0 %544
    %546 = vrot.lane.b32.xlu0 %v535, 124
    %v547 = vpop.permute.xlu0 %546
    %v552 = vadd.f32 %v520, %v541
    %v553 = vadd.f32 %v521, %v543
    %v554 = vadd.f32 %v522, %v545
    %v555 = vadd.f32 %v523, %v547
    %557 = vset.pattern.permute.xlu0 0
    %558 = vperm.xlu0 %557, %v504
    %v559 = vpop.permute.xlu0 %558
    %562 = vset.pattern.permute.xlu0 0
    %563 = vperm.xlu0 %562, %v505
    %v564 = vpop.permute.xlu0 %563
    %v566 = vadd.f32 %v552, %v559
    %v567 = vadd.f32 %v553, %v564
    %v568 = vadd.f32 %v554, %v559
    %v569 = vadd.f32 %v555, %v564
    %v570 = vmax.f32 %v566, 0.0
    %v571 = vmax.f32 %v567, 0.0
    %v572 = vmax.f32 %v568, 0.0
    %v573 = vmax.f32 %v569, 0.0
    %578 = vrot.lane.b32.xlu0 %v570, 70
    %v579 = vpop.permute.xlu0 %578
    %580 = vrot.lane.b32.xlu0 %v571, 70
    %v581 = vpop.permute.xlu0 %580
    %582 = vrot.lane.b32.xlu0 %v572, 70
    %v583 = vpop.permute.xlu0 %582
    %584 = vrot.lane.b32.xlu0 %v573, 70
    %v585 = vpop.permute.xlu0 %584
    %vm590 = vcmask 671280
    %591 = vst.msk [vmem:[#allocation2] sm:$0xff] %vm590, %v579
    %592 = vst.msk [vmem:[#allocation2 + $0x10] sm:$0xff] %vm590, %v581
    %593 = vst.msk [vmem:[#allocation2 + $0x20] sm:$0xff] %vm590, %v583
    %594 = vst.msk [vmem:[#allocation2 + $0x30] sm:$0xff] %vm590, %v585
    %v595 = vld [vmem:[%s1] sm:$0xff]
    %v596 = vld [vmem:[%s1 + $0x8] sm:$0xff]
    %v597 = vld [vmem:[%s2] sm:$0xff]
    %v598 = vld [vmem:[%s2 + $0x8] sm:$0xff]
    %v599 = vlaneseq
    %v600 = vshrl.u32 %v599, 7
    %v601 = vsub.s32 2, %v600
    %v602 = vrot.slane %v35, %v601
    %v603 = vlaneseq
    %v604 = vshrl.u32 %v603, 7
    %v605 = vsub.s32 2, %v604
    %v606 = vrot.slane %v36, %v605
    %608 = vset.pattern.permute.xlu0 0
    %609 = vperm.xlu0 %608, %v595
    %v610 = vpop.permute.xlu0 %609
    %613 = vset.pattern.permute.xlu0 0
    %614 = vperm.xlu0 %613, %v596
    %v615 = vpop.permute.xlu0 %614
    %v617 = vmul.f32 %v602, %v610
    %v618 = vmul.f32 %v602, %v615
    %v619 = vmul.f32 %v606, %v610
    %v620 = vmul.f32 %v606, %v615
    %v621 = vadd.f32 %v617, 0.0
    %v622 = vadd.f32 %v618, 0.0
    %v623 = vadd.f32 %v619, 0.0
    %v624 = vadd.f32 %v620, 0.0
    %625 = vset.pattern.permute.xlu0 1
    %626 = vperm.xlu0 %625, %v595
    %v627 = vpop.permute.xlu0 %626
    %629 = vset.pattern.permute.xlu0 1
    %630 = vperm.xlu0 %629, %v596
    %v631 = vpop.permute.xlu0 %630
    %v633 = vmul.f32 %v602, %v627
    %v634 = vmul.f32 %v602, %v631
    %v635 = vmul.f32 %v606, %v627
    %v636 = vmul.f32 %v606, %v631
    %641 = vrot.lane.b32.xlu0 %v633, 127
    %v642 = vpop.permute.xlu0 %641
    %643 = vrot.lane.b32.xlu0 %v634, 127
    %v644 = vpop.permute.xlu0 %643
    %645 = vrot.lane.b32.xlu0 %v635, 127
    %v646 = vpop.permute.xlu0 %645
    %647 = vrot.lane.b32.xlu0 %v636, 127
    %v648 = vpop.permute.xlu0 %647
    %v653 = vadd.f32 %v621, %v642
    %v654 = vadd.f32 %v622, %v644
    %v655 = vadd.f32 %v623, %v646
    %v656 = vadd.f32 %v624, %v648
    %658 = vset.pattern.permute.xlu0 0
    %659 = vperm.xlu0 %658, %v597
    %v660 = vpop.permute.xlu0 %659
    %663 = vset.pattern.permute.xlu0 0
    %664 = vperm.xlu0 %663, %v598
    %v665 = vpop.permute.xlu0 %664
    %v667 = vadd.f32 %v653, %v660
    %v668 = vadd.f32 %v654, %v665
    %v669 = vadd.f32 %v655, %v660
    %v670 = vadd.f32 %v656, %v665
    %v671 = vmax.f32 %v667, 0.0
    %v672 = vmax.f32 %v668, 0.0
    %v673 = vmax.f32 %v669, 0.0
    %v674 = vmax.f32 %v670, 0.0
    %679 = vrot.lane.b32.xlu0 %v671, 82
    %v680 = vpop.permute.xlu0 %679
    %681 = vrot.lane.b32.xlu0 %v672, 82
    %v682 = vpop.permute.xlu0 %681
    %683 = vrot.lane.b32.xlu0 %v673, 82
    %v684 = vpop.permute.xlu0 %683
    %685 = vrot.lane.b32.xlu0 %v674, 82
    %v686 = vpop.permute.xlu0 %685
    %vm691 = vcmask 794256
    %692 = vst.msk [vmem:[#allocation2] sm:$0xff] %vm691, %v680
    %693 = vst.msk [vmem:[#allocation2 + $0x10] sm:$0xff] %vm691, %v682
    %694 = vst.msk [vmem:[#allocation2 + $0x20] sm:$0xff] %vm691, %v684
    %695 = vst.msk [vmem:[#allocation2 + $0x30] sm:$0xff] %vm691, %v686
    %v696 = vld [vmem:[%s3] sm:$0xff]
    %v697 = vld [vmem:[%s3 + $0x8] sm:$0xff]
    %v698 = vld [vmem:[%s4] sm:$0xff]
    %v699 = vld [vmem:[%s4 + $0x8] sm:$0xff]
    %701 = vset.pattern.permute.xlu0 0
    %702 = vperm.xlu0 %701, %v696
    %v703 = vpop.permute.xlu0 %702
    %706 = vset.pattern.permute.xlu0 0
    %707 = vperm.xlu0 %706, %v697
    %v708 = vpop.permute.xlu0 %707
    %v710 = vmul.f32 %v602, %v703
    %v711 = vmul.f32 %v602, %v708
    %v712 = vmul.f32 %v606, %v703
    %v713 = vmul.f32 %v606, %v708
    %v714 = vadd.f32 %v710, 0.0
    %v715 = vadd.f32 %v711, 0.0
    %v716 = vadd.f32 %v712, 0.0
    %v717 = vadd.f32 %v713, 0.0
    %718 = vset.pattern.permute.xlu0 1
    %719 = vperm.xlu0 %718, %v696
    %v720 = vpop.permute.xlu0 %719
    %722 = vset.pattern.permute.xlu0 1
    %723 = vperm.xlu0 %722, %v697
    %v724 = vpop.permute.xlu0 %723
    %v726 = vmul.f32 %v602, %v720
    %v727 = vmul.f32 %v602, %v724
    %v728 = vmul.f32 %v606, %v720
    %v729 = vmul.f32 %v606, %v724
    %734 = vrot.lane.b32.xlu0 %v726, 126
    %v735 = vpop.permute.xlu0 %734
    %736 = vrot.lane.b32.xlu0 %v727, 126
    %v737 = vpop.permute.xlu0 %736
    %738 = vrot.lane.b32.xlu0 %v728, 126
    %v739 = vpop.permute.xlu0 %738
    %740 = vrot.lane.b32.xlu0 %v729, 126
    %v741 = vpop.permute.xlu0 %740
    %v746 = vadd.f32 %v714, %v735
    %v747 = vadd.f32 %v715, %v737
    %v748 = vadd.f32 %v716, %v739
    %v749 = vadd.f32 %v717, %v741
    %751 = vset.pattern.permute.xlu0 0
    %752 = vperm.xlu0 %751, %v698
    %v753 = vpop.permute.xlu0 %752
    %756 = vset.pattern.permute.xlu0 0
    %757 = vperm.xlu0 %756, %v699
    %v758 = vpop.permute.xlu0 %757
    %v760 = vadd.f32 %v746, %v753
    %v761 = vadd.f32 %v747, %v758
    %v762 = vadd.f32 %v748, %v753
    %v763 = vadd.f32 %v749, %v758
    %v764 = vmax.f32 %v760, 0.0
    %v765 = vmax.f32 %v761, 0.0
    %v766 = vmax.f32 %v762, 0.0
    %v767 = vmax.f32 %v763, 0.0
    %772 = vrot.lane.b32.xlu0 %v764, 97
    %v773 = vpop.permute.xlu0 %772
    %774 = vrot.lane.b32.xlu0 %v765, 97
    %v775 = vpop.permute.xlu0 %774
    %776 = vrot.lane.b32.xlu0 %v766, 97
    %v777 = vpop.permute.xlu0 %776
    %778 = vrot.lane.b32.xlu0 %v767, 97
    %v779 = vpop.permute.xlu0 %778
    %vm784 = vcmask 909064
    %785 = vst.msk [vmem:[#allocation2] sm:$0xff] %vm784, %v773
    %786 = vst.msk [vmem:[#allocation2 + $0x10] sm:$0xff] %vm784, %v775
    %787 = vst.msk [vmem:[#allocation2 + $0x20] sm:$0xff] %vm784, %v777
    %788 = vst.msk [vmem:[#allocation2 + $0x30] sm:$0xff] %vm784, %v779
    %v789 = vld [vmem:[%s5] sm:$0xff]
    %v790 = vld [vmem:[%s5 + $0x8] sm:$0xff]
    %v791 = vld [vmem:[%s6] sm:$0xff]
    %v792 = vld [vmem:[%s6 + $0x8] sm:$0xff]
    %794 = vset.pattern.permute.xlu0 0
    %795 = vperm.xlu0 %794, %v789
    %v796 = vpop.permute.xlu0 %795
    %799 = vset.pattern.permute.xlu0 0
    %800 = vperm.xlu0 %799, %v790
    %v801 = vpop.permute.xlu0 %800
    %v803 = vmul.f32 %v602, %v796
    %v804 = vmul.f32 %v602, %v801
    %v805 = vmul.f32 %v606, %v796
    %v806 = vmul.f32 %v606, %v801
    %v807 = vadd.f32 %v803, 0.0
    %v808 = vadd.f32 %v804, 0.0
    %v809 = vadd.f32 %v805, 0.0
    %v810 = vadd.f32 %v806, 0.0
    %811 = vset.pattern.permute.xlu0 1
    %812 = vperm.xlu0 %811, %v789
    %v813 = vpop.permute.xlu0 %812
    %815 = vset.pattern.permute.xlu0 1
    %816 = vperm.xlu0 %815, %v790
    %v817 = vpop.permute.xlu0 %816
    %v819 = vmul.f32 %v602, %v813
    %v820 = vmul.f32 %v602, %v817
    %v821 = vmul.f32 %v606, %v813
    %v822 = vmul.f32 %v606, %v817
    %827 = vrot.lane.b32.xlu0 %v819, 124
    %v828 = vpop.permute.xlu0 %827
    %829 = vrot.lane.b32.xlu0 %v820, 124
    %v830 = vpop.permute.xlu0 %829
    %831 = vrot.lane.b32.xlu0 %v821, 124
    %v832 = vpop.permute.xlu0 %831
    %833 = vrot.lane.b32.xlu0 %v822, 124
    %v834 = vpop.permute.xlu0 %833
    %v839 = vadd.f32 %v807, %v828
    %v840 = vadd.f32 %v808, %v830
    %v841 = vadd.f32 %v809, %v832
    %v842 = vadd.f32 %v810, %v834
    %844 = vset.pattern.permute.xlu0 0
    %845 = vperm.xlu0 %844, %v791
    %v846 = vpop.permute.xlu0 %845
    %849 = vset.pattern.permute.xlu0 0
    %850 = vperm.xlu0 %849, %v792
    %v851 = vpop.permute.xlu0 %850
    %v853 = vadd.f32 %v839, %v846
    %v854 = vadd.f32 %v840, %v851
    %v855 = vadd.f32 %v841, %v846
    %v856 = vadd.f32 %v842, %v851
    %v857 = vmax.f32 %v853, 0.0
    %v858 = vmax.f32 %v854, 0.0
    %v859 = vmax.f32 %v855, 0.0
    %v860 = vmax.f32 %v856, 0.0
    %865 = vrot.lane.b32.xlu0 %v857, 111
    %v866 = vpop.permute.xlu0 %865
    %867 = vrot.lane.b32.xlu0 %v858, 111
    %v868 = vpop.permute.xlu0 %867
    %869 = vrot.lane.b32.xlu0 %v859, 111
    %v870 = vpop.permute.xlu0 %869
    %871 = vrot.lane.b32.xlu0 %v860, 111
    %v872 = vpop.permute.xlu0 %871
    %vm877 = vcmask 1007480
    %878 = vst.msk [vmem:[#allocation2] sm:$0xff] %vm877, %v866
    %879 = vst.msk [vmem:[#allocation2 + $0x10] sm:$0xff] %vm877, %v868
    %880 = vst.msk [vmem:[#allocation2 + $0x20] sm:$0xff] %vm877, %v870
    %881 = vst.msk [vmem:[#allocation2 + $0x30] sm:$0xff] %vm877, %v872
    %v882 = vld [vmem:[%s1] sm:$0xff]
    %v883 = vld [vmem:[%s1 + $0x8] sm:$0xff]
    %v884 = vld [vmem:[%s2] sm:$0xff]
    %v885 = vld [vmem:[%s2 + $0x8] sm:$0xff]
    %v886 = vlaneseq
    %v887 = vshrl.u32 %v886, 7
    %v888 = vsub.s32 3, %v887
    %v889 = vrot.slane %v35, %v888
    %v890 = vlaneseq
    %v891 = vshrl.u32 %v890, 7
    %v892 = vsub.s32 3, %v891
    %v893 = vrot.slane %v36, %v892
    %895 = vset.pattern.permute.xlu0 0
    %896 = vperm.xlu0 %895, %v882
    %v897 = vpop.permute.xlu0 %896
    %900 = vset.pattern.permute.xlu0 0
    %901 = vperm.xlu0 %900, %v883
    %v902 = vpop.permute.xlu0 %901
    %v904 = vmul.f32 %v889, %v897
    %v905 = vmul.f32 %v889, %v902
    %v906 = vmul.f32 %v893, %v897
    %v907 = vmul.f32 %v893, %v902
    %v908 = vadd.f32 %v904, 0.0
    %v909 = vadd.f32 %v905, 0.0
    %v910 = vadd.f32 %v906, 0.0
    %v911 = vadd.f32 %v907, 0.0
    %912 = vset.pattern.permute.xlu0 1
    %913 = vperm.xlu0 %912, %v882
    %v914 = vpop.permute.xlu0 %913
    %916 = vset.pattern.permute.xlu0 1
    %917 = vperm.xlu0 %916, %v883
    %v918 = vpop.permute.xlu0 %917
    %v920 = vmul.f32 %v889, %v914
    %v921 = vmul.f32 %v889, %v918
    %v922 = vmul.f32 %v893, %v914
    %v923 = vmul.f32 %v893, %v918
    %928 = vrot.lane.b32.xlu0 %v920, 127
    %v929 = vpop.permute.xlu0 %928
    %930 = vrot.lane.b32.xlu0 %v921, 127
    %v931 = vpop.permute.xlu0 %930
    %932 = vrot.lane.b32.xlu0 %v922, 127
    %v933 = vpop.permute.xlu0 %932
    %934 = vrot.lane.b32.xlu0 %v923, 127
    %v935 = vpop.permute.xlu0 %934
    %v940 = vadd.f32 %v908, %v929
    %v941 = vadd.f32 %v909, %v931
    %v942 = vadd.f32 %v910, %v933
    %v943 = vadd.f32 %v911, %v935
    %945 = vset.pattern.permute.xlu0 0
    %946 = vperm.xlu0 %945, %v884
    %v947 = vpop.permute.xlu0 %946
    %950 = vset.pattern.permute.xlu0 0
    %951 = vperm.xlu0 %950, %v885
    %v952 = vpop.permute.xlu0 %951
    %v954 = vadd.f32 %v940, %v947
    %v955 = vadd.f32 %v941, %v952
    %v956 = vadd.f32 %v942, %v947
    %v957 = vadd.f32 %v943, %v952
    %v958 = vmax.f32 %v954, 0.0
    %v959 = vmax.f32 %v955, 0.0
    %v960 = vmax.f32 %v956, 0.0
    %v961 = vmax.f32 %v957, 0.0
    %966 = vrot.lane.b32.xlu0 %v958, 123
    %v967 = vpop.permute.xlu0 %966
    %968 = vrot.lane.b32.xlu0 %v959, 123
    %v969 = vpop.permute.xlu0 %968
    %970 = vrot.lane.b32.xlu0 %v960, 123
    %v971 = vpop.permute.xlu0 %970
    %972 = vrot.lane.b32.xlu0 %v961, 123
    %v973 = vpop.permute.xlu0 %972
    %vm978 = vcmask 1048536
    %979 = vst.msk [vmem:[#allocation2] sm:$0xff] %vm978, %v967
    %vm980 = vcmask 80896
    %981 = vst.msk [vmem:[#allocation2 + $0x8] sm:$0xff] %vm980, %v967
    %982 = vst.msk [vmem:[#allocation2 + $0x10] sm:$0xff] %vm978, %v969
    %983 = vst.msk [vmem:[#allocation2 + $0x18] sm:$0xff] %vm980, %v969
    %984 = vst.msk [vmem:[#allocation2 + $0x20] sm:$0xff] %vm978, %v971
    %985 = vst.msk [vmem:[#allocation2 + $0x28] sm:$0xff] %vm980, %v971
    %986 = vst.msk [vmem:[#allocation2 + $0x30] sm:$0xff] %vm978, %v973
    %987 = vst.msk [vmem:[#allocation2 + $0x38] sm:$0xff] %vm980, %v973
    %v988 = vld [vmem:[%s3] sm:$0xff]
    %v989 = vld [vmem:[%s3 + $0x8] sm:$0xff]
    %v990 = vld [vmem:[%s4] sm:$0xff]
    %v991 = vld [vmem:[%s4 + $0x8] sm:$0xff]
    %993 = vset.pattern.permute.xlu0 0
    %994 = vperm.xlu0 %993, %v988
    %v995 = vpop.permute.xlu0 %994
    %998 = vset.pattern.permute.xlu0 0
    %999 = vperm.xlu0 %998, %v989
    %v1000 = vpop.permute.xlu0 %999
    %v1002 = vmul.f32 %v889, %v995
    %v1003 = vmul.f32 %v889, %v1000
    %v1004 = vmul.f32 %v893, %v995
    %v1005 = vmul.f32 %v893, %v1000
    %v1006 = vadd.f32 %v1002, 0.0
    %v1007 = vadd.f32 %v1003, 0.0
    %v1008 = vadd.f32 %v1004, 0.0
    %v1009 = vadd.f32 %v1005, 0.0
    %1010 = vset.pattern.permute.xlu0 1
    %1011 = vperm.xlu0 %1010, %v988
    %v1012 = vpop.permute.xlu0 %1011
    %1014 = vset.pattern.permute.xlu0 1
    %1015 = vperm.xlu0 %1014, %v989
    %v1016 = vpop.permute.xlu0 %1015
    %v1018 = vmul.f32 %v889, %v1012
    %v1019 = vmul.f32 %v889, %v1016
    %v1020 = vmul.f32 %v893, %v1012
    %v1021 = vmul.f32 %v893, %v1016
    %1026 = vrot.lane.b32.xlu0 %v1018, 126
    %v1027 = vpop.permute.xlu0 %1026
    %1028 = vrot.lane.b32.xlu0 %v1019, 126
    %v1029 = vpop.permute.xlu0 %1028
    %1030 = vrot.lane.b32.xlu0 %v1020, 126
    %v1031 = vpop.permute.xlu0 %1030
    %1032 = vrot.lane.b32.xlu0 %v1021, 126
    %v1033 = vpop.permute.xlu0 %1032
    %v1038 = vadd.f32 %v1006, %v1027
    %v1039 = vadd.f32 %v1007, %v1029
    %v1040 = vadd.f32 %v1008, %v1031
    %v1041 = vadd.f32 %v1009, %v1033
    %1043 = vset.pattern.permute.xlu0 0
    %1044 = vperm.xlu0 %1043, %v990
    %v1045 = vpop.permute.xlu0 %1044
    %1048 = vset.pattern.permute.xlu0 0
    %1049 = vperm.xlu0 %1048, %v991
    %v1050 = vpop.permute.xlu0 %1049
    %v1052 = vadd.f32 %v1038, %v1045
    %v1053 = vadd.f32 %v1039, %v1050
    %v1054 = vadd.f32 %v1040, %v1045
    %v1055 = vadd.f32 %v1041, %v1050
    %v1056 = vmax.f32 %v1052, 0.0
    %v1057 = vmax.f32 %v1053, 0.0
    %v1058 = vmax.f32 %v1054, 0.0
    %v1059 = vmax.f32 %v1055, 0.0
    %1064 = vrot.lane.b32.xlu0 %v1056, 10
    %v1065 = vpop.permute.xlu0 %1064
    %1066 = vrot.lane.b32.xlu0 %v1057, 10
    %v1067 = vpop.permute.xlu0 %1066
    %1068 = vrot.lane.b32.xlu0 %v1058, 10
    %v1069 = vpop.permute.xlu0 %1068
    %1070 = vrot.lane.b32.xlu0 %v1059, 10
    %v1071 = vpop.permute.xlu0 %1070
    %vm1076 = vcmask 195664
    %1077 = vst.msk [vmem:[#allocation2 + $0x8] sm:$0xff] %vm1076, %v1065
    %1078 = vst.msk [vmem:[#allocation2 + $0x18] sm:$0xff] %vm1076, %v1067
    %1079 = vst.msk [vmem:[#allocation2 + $0x28] sm:$0xff] %vm1076, %v1069
    %1080 = vst.msk [vmem:[#allocation2 + $0x38] sm:$0xff] %vm1076, %v1071
    %v1081 = vld [vmem:[%s5] sm:$0xff]
    %v1082 = vld [vmem:[%s5 + $0x8] sm:$0xff]
    %v1083 = vld [vmem:[%s6] sm:$0xff]
    %v1084 = vld [vmem:[%s6 + $0x8] sm:$0xff]
    %1086 = vset.pattern.permute.xlu0 0
    %1087 = vperm.xlu0 %1086, %v1081
    %v1088 = vpop.permute.xlu0 %1087
    %1091 = vset.pattern.permute.xlu0 0
    %1092 = vperm.xlu0 %1091, %v1082
    %v1093 = vpop.permute.xlu0 %1092
    %v1095 = vmul.f32 %v889, %v1088
    %v1096 = vmul.f32 %v889, %v1093
    %v1097 = vmul.f32 %v893, %v1088
    %v1098 = vmul.f32 %v893, %v1093
    %v1099 = vadd.f32 %v1095, 0.0
    %v1100 = vadd.f32 %v1096, 0.0
    %v1101 = vadd.f32 %v1097, 0.0
    %v1102 = vadd.f32 %v1098, 0.0
    %1103 = vset.pattern.permute.xlu0 1
    %1104 = vperm.xlu0 %1103, %v1081
    %v1105 = vpop.permute.xlu0 %1104
    %1107 = vset.pattern.permute.xlu0 1
    %1108 = vperm.xlu0 %1107, %v1082
    %v1109 = vpop.permute.xlu0 %1108
    %v1111 = vmul.f32 %v889, %v1105
    %v1112 = vmul.f32 %v889, %v1109
    %v1113 = vmul.f32 %v893, %v1105
    %v1114 = vmul.f32 %v893, %v1109
    %1119 = vrot.lane.b32.xlu0 %v1111, 124
    %v1120 = vpop.permute.xlu0 %1119
    %1121 = vrot.lane.b32.xlu0 %v1112, 124
    %v1122 = vpop.permute.xlu0 %1121
    %1123 = vrot.lane.b32.xlu0 %v1113, 124
    %v1124 = vpop.permute.xlu0 %1123
    %1125 = vrot.lane.b32.xlu0 %v1114, 124
    %v1126 = vpop.permute.xlu0 %1125
    %v1131 = vadd.f32 %v1099, %v1120
    %v1132 = vadd.f32 %v1100, %v1122
    %v1133 = vadd.f32 %v1101, %v1124
    %v1134 = vadd.f32 %v1102, %v1126
    %1136 = vset.pattern.permute.xlu0 0
    %1137 = vperm.xlu0 %1136, %v1083
    %v1138 = vpop.permute.xlu0 %1137
    %1141 = vset.pattern.permute.xlu0 0
    %1142 = vperm.xlu0 %1141, %v1084
    %v1143 = vpop.permute.xlu0 %1142
    %v1145 = vadd.f32 %v1131, %v1138
    %v1146 = vadd.f32 %v1132, %v1143
    %v1147 = vadd.f32 %v1133, %v1138
    %v1148 = vadd.f32 %v1134, %v1143
    %v1149 = vmax.f32 %v1145, 0.0
    %v1150 = vmax.f32 %v1146, 0.0
    %v1151 = vmax.f32 %v1147, 0.0
    %v1152 = vmax.f32 %v1148, 0.0
    %1157 = vrot.lane.b32.xlu0 %v1149, 24
    %v1158 = vpop.permute.xlu0 %1157
    %1159 = vrot.lane.b32.xlu0 %v1150, 24
    %v1160 = vpop.permute.xlu0 %1159
    %1161 = vrot.lane.b32.xlu0 %v1151, 24
    %v1162 = vpop.permute.xlu0 %1161
    %1163 = vrot.lane.b32.xlu0 %v1152, 24
    %v1164 = vpop.permute.xlu0 %1163
    %vm1169 = vcmask 294080
    %1170 = vst.msk [vmem:[#allocation2 + $0x8] sm:$0xff] %vm1169, %v1158
    %1171 = vst.msk [vmem:[#allocation2 + $0x18] sm:$0xff] %vm1169, %v1160
    %1172 = vst.msk [vmem:[#allocation2 + $0x28] sm:$0xff] %vm1169, %v1162
    %1173 = vst.msk [vmem:[#allocation2 + $0x38] sm:$0xff] %vm1169, %v1164
    %v1174 = vld [vmem:[%s1] sm:$0xff]
    %v1175 = vld [vmem:[%s1 + $0x8] sm:$0xff]
    %v1176 = vld [vmem:[%s2] sm:$0xff]
    %v1177 = vld [vmem:[%s2 + $0x8] sm:$0xff]
    %v1178 = vlaneseq
    %v1179 = vshrl.u32 %v1178, 7
    %v1180 = vsub.s32 4, %v1179
    %v1181 = vrot.slane %v35, %v1180
    %v1182 = vlaneseq
    %v1183 = vshrl.u32 %v1182, 7
    %v1184 = vsub.s32 4, %v1183
    %v1185 = vrot.slane %v36, %v1184
    %1187 = vset.pattern.permute.xlu0 0
    %1188 = vperm.xlu0 %1187, %v1174
    %v1189 = vpop.permute.xlu0 %1188
    %1192 = vset.pattern.permute.xlu0 0
    %1193 = vperm.xlu0 %1192, %v1175
    %v1194 = vpop.permute.xlu0 %1193
    %v1196 = vmul.f32 %v1181, %v1189
    %v1197 = vmul.f32 %v1181, %v1194
    %v1198 = vmul.f32 %v1185, %v1189
    %v1199 = vmul.f32 %v1185, %v1194
    %v1200 = vadd.f32 %v1196, 0.0
    %v1201 = vadd.f32 %v1197, 0.0
    %v1202 = vadd.f32 %v1198, 0.0
    %v1203 = vadd.f32 %v1199, 0.0
    %1204 = vset.pattern.permute.xlu0 1
    %1205 = vperm.xlu0 %1204, %v1174
    %v1206 = vpop.permute.xlu0 %1205
    %1208 = vset.pattern.permute.xlu0 1
    %1209 = vperm.xlu0 %1208, %v1175
    %v1210 = vpop.permute.xlu0 %1209
    %v1212 = vmul.f32 %v1181, %v1206
    %v1213 = vmul.f32 %v1181, %v1210
    %v1214 = vmul.f32 %v1185, %v1206
    %v1215 = vmul.f32 %v1185, %v1210
    %1220 = vrot.lane.b32.xlu0 %v1212, 127
    %v1221 = vpop.permute.xlu0 %1220
    %1222 = vrot.lane.b32.xlu0 %v1213, 127
    %v1223 = vpop.permute.xlu0 %1222
    %1224 = vrot.lane.b32.xlu0 %v1214, 127
    %v1225 = vpop.permute.xlu0 %1224
    %1226 = vrot.lane.b32.xlu0 %v1215, 127
    %v1227 = vpop.permute.xlu0 %1226
    %v1232 = vadd.f32 %v1200, %v1221
    %v1233 = vadd.f32 %v1201, %v1223
    %v1234 = vadd.f32 %v1202, %v1225
    %v1235 = vadd.f32 %v1203, %v1227
    %1237 = vset.pattern.permute.xlu0 0
    %1238 = vperm.xlu0 %1237, %v1176
    %v1239 = vpop.permute.xlu0 %1238
    %1242 = vset.pattern.permute.xlu0 0
    %1243 = vperm.xlu0 %1242, %v1177
    %v1244 = vpop.permute.xlu0 %1243
    %v1246 = vadd.f32 %v1232, %v1239
    %v1247 = vadd.f32 %v1233, %v1244
    %v1248 = vadd.f32 %v1234, %v1239
    %v1249 = vadd.f32 %v1235, %v1244
    %v1250 = vmax.f32 %v1246, 0.0
    %v1251 = vmax.f32 %v1247, 0.0
    %v1252 = vmax.f32 %v1248, 0.0
    %v1253 = vmax.f32 %v1249, 0.0
    %1258 = vrot.lane.b32.xlu0 %v1250, 36
    %v1259 = vpop.permute.xlu0 %1258
    %1260 = vrot.lane.b32.xlu0 %v1251, 36
    %v1261 = vpop.permute.xlu0 %1260
    %1262 = vrot.lane.b32.xlu0 %v1252, 36
    %v1263 = vpop.permute.xlu0 %1262
    %1264 = vrot.lane.b32.xlu0 %v1253, 36
    %v1265 = vpop.permute.xlu0 %1264
    %vm1270 = vcmask 417056
    %1271 = vst.msk [vmem:[#allocation2 + $0x8] sm:$0xff] %vm1270, %v1259
    %1272 = vst.msk [vmem:[#allocation2 + $0x18] sm:$0xff] %vm1270, %v1261
    %1273 = vst.msk [vmem:[#allocation2 + $0x28] sm:$0xff] %vm1270, %v1263
    %1274 = vst.msk [vmem:[#allocation2 + $0x38] sm:$0xff] %vm1270, %v1265
    %v1275 = vld [vmem:[%s3] sm:$0xff]
    %v1276 = vld [vmem:[%s3 + $0x8] sm:$0xff]
    %v1277 = vld [vmem:[%s4] sm:$0xff]
    %v1278 = vld [vmem:[%s4 + $0x8] sm:$0xff]
    %1280 = vset.pattern.permute.xlu0 0
    %1281 = vperm.xlu0 %1280, %v1275
    %v1282 = vpop.permute.xlu0 %1281
    %1285 = vset.pattern.permute.xlu0 0
    %1286 = vperm.xlu0 %1285, %v1276
    %v1287 = vpop.permute.xlu0 %1286
    %v1289 = vmul.f32 %v1181, %v1282
    %v1290 = vmul.f32 %v1181, %v1287
    %v1291 = vmul.f32 %v1185, %v1282
    %v1292 = vmul.f32 %v1185, %v1287
    %v1293 = vadd.f32 %v1289, 0.0
    %v1294 = vadd.f32 %v1290, 0.0
    %v1295 = vadd.f32 %v1291, 0.0
    %v1296 = vadd.f32 %v1292, 0.0
    %1297 = vset.pattern.permute.xlu0 1
    %1298 = vperm.xlu0 %1297, %v1275
    %v1299 = vpop.permute.xlu0 %1298
    %1301 = vset.pattern.permute.xlu0 1
    %1302 = vperm.xlu0 %1301, %v1276
    %v1303 = vpop.permute.xlu0 %1302
    %v1305 = vmul.f32 %v1181, %v1299
    %v1306 = vmul.f32 %v1181, %v1303
    %v1307 = vmul.f32 %v1185, %v1299
    %v1308 = vmul.f32 %v1185, %v1303
    %1313 = vrot.lane.b32.xlu0 %v1305, 126
    %v1314 = vpop.permute.xlu0 %1313
    %1315 = vrot.lane.b32.xlu0 %v1306, 126
    %v1316 = vpop.permute.xlu0 %1315
    %1317 = vrot.lane.b32.xlu0 %v1307, 126
    %v1318 = vpop.permute.xlu0 %1317
    %1319 = vrot.lane.b32.xlu0 %v1308, 126
    %v1320 = vpop.permute.xlu0 %1319
    %v1325 = vadd.f32 %v1293, %v1314
    %v1326 = vadd.f32 %v1294, %v1316
    %v1327 = vadd.f32 %v1295, %v1318
    %v1328 = vadd.f32 %v1296, %v1320
    %1330 = vset.pattern.permute.xlu0 0
    %1331 = vperm.xlu0 %1330, %v1277
    %v1332 = vpop.permute.xlu0 %1331
    %1335 = vset.pattern.permute.xlu0 0
    %1336 = vperm.xlu0 %1335, %v1278
    %v1337 = vpop.permute.xlu0 %1336
    %v1339 = vadd.f32 %v1325, %v1332
    %v1340 = vadd.f32 %v1326, %v1337
    %v1341 = vadd.f32 %v1327, %v1332
    %v1342 = vadd.f32 %v1328, %v1337
    %v1343 = vmax.f32 %v1339, 0.0
    %v1344 = vmax.f32 %v1340, 0.0
    %v1345 = vmax.f32 %v1341, 0.0
    %v1346 = vmax.f32 %v1342, 0.0
    %1351 = vrot.lane.b32.xlu0 %v1343, 51
    %v1352 = vpop.permute.xlu0 %1351
    %1353 = vrot.lane.b32.xlu0 %v1344, 51
    %v1354 = vpop.permute.xlu0 %1353
    %1355 = vrot.lane.b32.xlu0 %v1345, 51
    %v1356 = vpop.permute.xlu0 %1355
    %1357 = vrot.lane.b32.xlu0 %v1346, 51
    %v1358 = vpop.permute.xlu0 %1357
    %vm1363 = vcmask 531864
    %1364 = vst.msk [vmem:[#allocation2 + $0x8] sm:$0xff] %vm1363, %v1352
    %1365 = vst.msk [vmem:[#allocation2 + $0x18] sm:$0xff] %vm1363, %v1354
    %1366 = vst.msk [vmem:[#allocation2 + $0x28] sm:$0xff] %vm1363, %v1356
    %1367 = vst.msk [vmem:[#allocation2 + $0x38] sm:$0xff] %vm1363, %v1358
    %v1368 = vld [vmem:[%s5] sm:$0xff]
    %v1369 = vld [vmem:[%s5 + $0x8] sm:$0xff]
    %v1370 = vld [vmem:[%s6] sm:$0xff]
    %v1371 = vld [vmem:[%s6 + $0x8] sm:$0xff]
    %1373 = vset.pattern.permute.xlu0 0
    %1374 = vperm.xlu0 %1373, %v1368
    %v1375 = vpop.permute.xlu0 %1374
    %1378 = vset.pattern.permute.xlu0 0
    %1379 = vperm.xlu0 %1378, %v1369
    %v1380 = vpop.permute.xlu0 %1379
    %v1382 = vmul.f32 %v1181, %v1375
    %v1383 = vmul.f32 %v1181, %v1380
    %v1384 = vmul.f32 %v1185, %v1375
    %v1385 = vmul.f32 %v1185, %v1380
    %v1386 = vadd.f32 %v1382, 0.0
    %v1387 = vadd.f32 %v1383, 0.0
    %v1388 = vadd.f32 %v1384, 0.0
    %v1389 = vadd.f32 %v1385, 0.0
    %1390 = vset.pattern.permute.xlu0 1
    %1391 = vperm.xlu0 %1390, %v1368
    %v1392 = vpop.permute.xlu0 %1391
    %1394 = vset.pattern.permute.xlu0 1
    %1395 = vperm.xlu0 %1394, %v1369
    %v1396 = vpop.permute.xlu0 %1395
    %v1398 = vmul.f32 %v1181, %v1392
    %v1399 = vmul.f32 %v1181, %v1396
    %v1400 = vmul.f32 %v1185, %v1392
    %v1401 = vmul.f32 %v1185, %v1396
    %1406 = vrot.lane.b32.xlu0 %v1398, 124
    %v1407 = vpop.permute.xlu0 %1406
    %1408 = vrot.lane.b32.xlu0 %v1399, 124
    %v1409 = vpop.permute.xlu0 %1408
    %1410 = vrot.lane.b32.xlu0 %v1400, 124
    %v1411 = vpop.permute.xlu0 %1410
    %1412 = vrot.lane.b32.xlu0 %v1401, 124
    %v1413 = vpop.permute.xlu0 %1412
    %v1418 = vadd.f32 %v1386, %v1407
    %v1419 = vadd.f32 %v1387, %v1409
    %v1420 = vadd.f32 %v1388, %v1411
    %v1421 = vadd.f32 %v1389, %v1413
    %1423 = vset.pattern.permute.xlu0 0
    %1424 = vperm.xlu0 %1423, %v1370
    %v1425 = vpop.permute.xlu0 %1424
    %1428 = vset.pattern.permute.xlu0 0
    %1429 = vperm.xlu0 %1428, %v1371
    %v1430 = vpop.permute.xlu0 %1429
    %v1432 = vadd.f32 %v1418, %v1425
    %v1433 = vadd.f32 %v1419, %v1430
    %v1434 = vadd.f32 %v1420, %v1425
    %v1435 = vadd.f32 %v1421, %v1430
    %v1436 = vmax.f32 %v1432, 0.0
    %v1437 = vmax.f32 %v1433, 0.0
    %v1438 = vmax.f32 %v1434, 0.0
    %v1439 = vmax.f32 %v1435, 0.0
    %1444 = vrot.lane.b32.xlu0 %v1436, 65
    %v1445 = vpop.permute.xlu0 %1444
    %1446 = vrot.lane.b32.xlu0 %v1437, 65
    %v1447 = vpop.permute.xlu0 %1446
    %1448 = vrot.lane.b32.xlu0 %v1438, 65
    %v1449 = vpop.permute.xlu0 %1448
    %1450 = vrot.lane.b32.xlu0 %v1439, 65
    %v1451 = vpop.permute.xlu0 %1450
    %vm1456 = vcmask 630280
    %1457 = vst.msk [vmem:[#allocation2 + $0x8] sm:$0xff] %vm1456, %v1445
    %1458 = vst.msk [vmem:[#allocation2 + $0x18] sm:$0xff] %vm1456, %v1447
    %1459 = vst.msk [vmem:[#allocation2 + $0x28] sm:$0xff] %vm1456, %v1449
    %1460 = vst.msk [vmem:[#allocation2 + $0x38] sm:$0xff] %vm1456, %v1451
    %v1461 = vld [vmem:[%s1] sm:$0xff]
    %v1462 = vld [vmem:[%s1 + $0x8] sm:$0xff]
    %v1463 = vld [vmem:[%s2] sm:$0xff]
    %v1464 = vld [vmem:[%s2 + $0x8] sm:$0xff]
    %v1465 = vlaneseq
    %v1466 = vshrl.u32 %v1465, 7
    %v1467 = vsub.s32 5, %v1466
    %v1468 = vrot.slane %v35, %v1467
    %v1469 = vlaneseq
    %v1470 = vshrl.u32 %v1469, 7
    %v1471 = vsub.s32 5, %v1470
    %v1472 = vrot.slane %v36, %v1471
    %1474 = vset.pattern.permute.xlu0 0
    %1475 = vperm.xlu0 %1474, %v1461
    %v1476 = vpop.permute.xlu0 %1475
    %1479 = vset.pattern.permute.xlu0 0
    %1480 = vperm.xlu0 %1479, %v1462
    %v1481 = vpop.permute.xlu0 %1480
    %v1483 = vmul.f32 %v1468, %v1476
    %v1484 = vmul.f32 %v1468, %v1481
    %v1485 = vmul.f32 %v1472, %v1476
    %v1486 = vmul.f32 %v1472, %v1481
    %v1487 = vadd.f32 %v1483, 0.0
    %v1488 = vadd.f32 %v1484, 0.0
    %v1489 = vadd.f32 %v1485, 0.0
    %v1490 = vadd.f32 %v1486, 0.0
    %1491 = vset.pattern.permute.xlu0 1
    %1492 = vperm.xlu0 %1491, %v1461
    %v1493 = vpop.permute.xlu0 %1492
    %1495 = vset.pattern.permute.xlu0 1
    %1496 = vperm.xlu0 %1495, %v1462
    %v1497 = vpop.permute.xlu0 %1496
    %v1499 = vmul.f32 %v1468, %v1493
    %v1500 = vmul.f32 %v1468, %v1497
    %v1501 = vmul.f32 %v1472, %v1493
    %v1502 = vmul.f32 %v1472, %v1497
    %1507 = vrot.lane.b32.xlu0 %v1499, 127
    %v1508 = vpop.permute.xlu0 %1507
    %1509 = vrot.lane.b32.xlu0 %v1500, 127
    %v1510 = vpop.permute.xlu0 %1509
    %1511 = vrot.lane.b32.xlu0 %v1501, 127
    %v1512 = vpop.permute.xlu0 %1511
    %1513 = vrot.lane.b32.xlu0 %v1502, 127
    %v1514 = vpop.permute.xlu0 %1513
    %v1519 = vadd.f32 %v1487, %v1508
    %v1520 = vadd.f32 %v1488, %v1510
    %v1521 = vadd.f32 %v1489, %v1512
    %v1522 = vadd.f32 %v1490, %v1514
    %1524 = vset.pattern.permute.xlu0 0
    %1525 = vperm.xlu0 %1524, %v1463
    %v1526 = vpop.permute.xlu0 %1525
    %1529 = vset.pattern.permute.xlu0 0
    %1530 = vperm.xlu0 %1529, %v1464
    %v1531 = vpop.permute.xlu0 %1530
    %v1533 = vadd.f32 %v1519, %v1526
    %v1534 = vadd.f32 %v1520, %v1531
    %v1535 = vadd.f32 %v1521, %v1526
    %v1536 = vadd.f32 %v1522, %v1531
    %v1537 = vmax.f32 %v1533, 0.0
    %v1538 = vmax.f32 %v1534, 0.0
    %v1539 = vmax.f32 %v1535, 0.0
    %v1540 = vmax.f32 %v1536, 0.0
    %1545 = vrot.lane.b32.xlu0 %v1537, 77
    %v1546 = vpop.permute.xlu0 %1545
    %1547 = vrot.lane.b32.xlu0 %v1538, 77
    %v1548 = vpop.permute.xlu0 %1547
    %1549 = vrot.lane.b32.xlu0 %v1539, 77
    %v1550 = vpop.permute.xlu0 %1549
    %1551 = vrot.lane.b32.xlu0 %v1540, 77
    %v1552 = vpop.permute.xlu0 %1551
    %vm1557 = vcmask 753256
    %1558 = vst.msk [vmem:[#allocation2 + $0x8] sm:$0xff] %vm1557, %v1546
    %1559 = vst.msk [vmem:[#allocation2 + $0x18] sm:$0xff] %vm1557, %v1548
    %1560 = vst.msk [vmem:[#allocation2 + $0x28] sm:$0xff] %vm1557, %v1550
    %1561 = vst.msk [vmem:[#allocation2 + $0x38] sm:$0xff] %vm1557, %v1552
    %v1562 = vld [vmem:[%s3] sm:$0xff]
    %v1563 = vld [vmem:[%s3 + $0x8] sm:$0xff]
    %v1564 = vld [vmem:[%s4] sm:$0xff]
    %v1565 = vld [vmem:[%s4 + $0x8] sm:$0xff]
    %1567 = vset.pattern.permute.xlu0 0
    %1568 = vperm.xlu0 %1567, %v1562
    %v1569 = vpop.permute.xlu0 %1568
    %1572 = vset.pattern.permute.xlu0 0
    %1573 = vperm.xlu0 %1572, %v1563
    %v1574 = vpop.permute.xlu0 %1573
    %v1576 = vmul.f32 %v1468, %v1569
    %v1577 = vmul.f32 %v1468, %v1574
    %v1578 = vmul.f32 %v1472, %v1569
    %v1579 = vmul.f32 %v1472, %v1574
    %v1580 = vadd.f32 %v1576, 0.0
    %v1581 = vadd.f32 %v1577, 0.0
    %v1582 = vadd.f32 %v1578, 0.0
    %v1583 = vadd.f32 %v1579, 0.0
    %1584 = vset.pattern.permute.xlu0 1
    %1585 = vperm.xlu0 %1584, %v1562
    %v1586 = vpop.permute.xlu0 %1585
    %1588 = vset.pattern.permute.xlu0 1
    %1589 = vperm.xlu0 %1588, %v1563
    %v1590 = vpop.permute.xlu0 %1589
    %v1592 = vmul.f32 %v1468, %v1586
    %v1593 = vmul.f32 %v1468, %v1590
    %v1594 = vmul.f32 %v1472, %v1586
    %v1595 = vmul.f32 %v1472, %v1590
    %1600 = vrot.lane.b32.xlu0 %v1592, 126
    %v1601 = vpop.permute.xlu0 %1600
    %1602 = vrot.lane.b32.xlu0 %v1593, 126
    %v1603 = vpop.permute.xlu0 %1602
    %1604 = vrot.lane.b32.xlu0 %v1594, 126
    %v1605 = vpop.permute.xlu0 %1604
    %1606 = vrot.lane.b32.xlu0 %v1595, 126
    %v1607 = vpop.permute.xlu0 %1606
    %v1612 = vadd.f32 %v1580, %v1601
    %v1613 = vadd.f32 %v1581, %v1603
    %v1614 = vadd.f32 %v1582, %v1605
    %v1615 = vadd.f32 %v1583, %v1607
    %1617 = vset.pattern.permute.xlu0 0
    %1618 = vperm.xlu0 %1617, %v1564
    %v1619 = vpop.permute.xlu0 %1618
    %1622 = vset.pattern.permute.xlu0 0
    %1623 = vperm.xlu0 %1622, %v1565
    %v1624 = vpop.permute.xlu0 %1623
    %v1626 = vadd.f32 %v1612, %v1619
    %v1627 = vadd.f32 %v1613, %v1624
    %v1628 = vadd.f32 %v1614, %v1619
    %v1629 = vadd.f32 %v1615, %v1624
    %v1630 = vmax.f32 %v1626, 0.0
    %v1631 = vmax.f32 %v1627, 0.0
    %v1632 = vmax.f32 %v1628, 0.0
    %v1633 = vmax.f32 %v1629, 0.0
    %1638 = vrot.lane.b32.xlu0 %v1630, 92
    %v1639 = vpop.permute.xlu0 %1638
    %1640 = vrot.lane.b32.xlu0 %v1631, 92
    %v1641 = vpop.permute.xlu0 %1640
    %1642 = vrot.lane.b32.xlu0 %v1632, 92
    %v1643 = vpop.permute.xlu0 %1642
    %1644 = vrot.lane.b32.xlu0 %v1633, 92
    %v1645 = vpop.permute.xlu0 %1644
    %vm1650 = vcmask 868064
    %1651 = vst.msk [vmem:[#allocation2 + $0x8] sm:$0xff] %vm1650, %v1639
    %1652 = vst.msk [vmem:[#allocation2 + $0x18] sm:$0xff] %vm1650, %v1641
    %1653 = vst.msk [vmem:[#allocation2 + $0x28] sm:$0xff] %vm1650, %v1643
    %1654 = vst.msk [vmem:[#allocation2 + $0x38] sm:$0xff] %vm1650, %v1645
    %v1655 = vld [vmem:[%s5] sm:$0xff]
    %v1656 = vld [vmem:[%s5 + $0x8] sm:$0xff]
    %v1657 = vld [vmem:[%s6] sm:$0xff]
    %v1658 = vld [vmem:[%s6 + $0x8] sm:$0xff]
    %1660 = vset.pattern.permute.xlu0 0
    %1661 = vperm.xlu0 %1660, %v1655
    %v1662 = vpop.permute.xlu0 %1661
    %1665 = vset.pattern.permute.xlu0 0
    %1666 = vperm.xlu0 %1665, %v1656
    %v1667 = vpop.permute.xlu0 %1666
    %v1669 = vmul.f32 %v1468, %v1662
    %v1670 = vmul.f32 %v1468, %v1667
    %v1671 = vmul.f32 %v1472, %v1662
    %v1672 = vmul.f32 %v1472, %v1667
    %v1673 = vadd.f32 %v1669, 0.0
    %v1674 = vadd.f32 %v1670, 0.0
    %v1675 = vadd.f32 %v1671, 0.0
    %v1676 = vadd.f32 %v1672, 0.0
    %1677 = vset.pattern.permute.xlu0 1
    %1678 = vperm.xlu0 %1677, %v1655
    %v1679 = vpop.permute.xlu0 %1678
    %1681 = vset.pattern.permute.xlu0 1
    %1682 = vperm.xlu0 %1681, %v1656
    %v1683 = vpop.permute.xlu0 %1682
    %v1685 = vmul.f32 %v1468, %v1679
    %v1686 = vmul.f32 %v1468, %v1683
    %v1687 = vmul.f32 %v1472, %v1679
    %v1688 = vmul.f32 %v1472, %v1683
    %1693 = vrot.lane.b32.xlu0 %v1685, 124
    %v1694 = vpop.permute.xlu0 %1693
    %1695 = vrot.lane.b32.xlu0 %v1686, 124
    %v1696 = vpop.permute.xlu0 %1695
    %1697 = vrot.lane.b32.xlu0 %v1687, 124
    %v1698 = vpop.permute.xlu0 %1697
    %1699 = vrot.lane.b32.xlu0 %v1688, 124
    %v1700 = vpop.permute.xlu0 %1699
    %v1705 = vadd.f32 %v1673, %v1694
    %v1706 = vadd.f32 %v1674, %v1696
    %v1707 = vadd.f32 %v1675, %v1698
    %v1708 = vadd.f32 %v1676, %v1700
    %1710 = vset.pattern.permute.xlu0 0
    %1711 = vperm.xlu0 %1710, %v1657
    %v1712 = vpop.permute.xlu0 %1711
    %1715 = vset.pattern.permute.xlu0 0
    %1716 = vperm.xlu0 %1715, %v1658
    %v1717 = vpop.permute.xlu0 %1716
    %v1719 = vadd.f32 %v1705, %v1712
    %v1720 = vadd.f32 %v1706, %v1717
    %v1721 = vadd.f32 %v1707, %v1712
    %v1722 = vadd.f32 %v1708, %v1717
    %v1723 = vmax.f32 %v1719, 0.0
    %v1724 = vmax.f32 %v1720, 0.0
    %v1725 = vmax.f32 %v1721, 0.0
    %v1726 = vmax.f32 %v1722, 0.0
    %1731 = vrot.lane.b32.xlu0 %v1723, 106
    %v1732 = vpop.permute.xlu0 %1731
    %1733 = vrot.lane.b32.xlu0 %v1724, 106
    %v1734 = vpop.permute.xlu0 %1733
    %1735 = vrot.lane.b32.xlu0 %v1725, 106
    %v1736 = vpop.permute.xlu0 %1735
    %1737 = vrot.lane.b32.xlu0 %v1726, 106
    %v1738 = vpop.permute.xlu0 %1737
    %vm1743 = vcmask 966480
    %1744 = vst.msk [vmem:[#allocation2 + $0x8] sm:$0xff] %vm1743, %v1732
    %1745 = vst.msk [vmem:[#allocation2 + $0x18] sm:$0xff] %vm1743, %v1734
    %1746 = vst.msk [vmem:[#allocation2 + $0x28] sm:$0xff] %vm1743, %v1736
    %1747 = vst.msk [vmem:[#allocation2 + $0x38] sm:$0xff] %vm1743, %v1738
    // Predicated region
    $region30: #{tpu_custom_call.1} parent=1 // pred_check
      _
    $region31: #{tpu_custom_call.1} parent=1 // pred_check_branch
      %1749 = sbr.rel (0) target = $region33
    $region32: #{tpu_custom_call.1} parent=1 // pred_region
      %s1751 = ssub.s32 1024, 1024
      %1752 = vsyncadd [#allocation3], %s1751
      %s1753 = sshll.u32 [#allocation2], 4
      %s1754 = int_to_ptr.vmem [resolvable:$true] %s1753
      %1759 = dma.vmem_to_hbm [thread:$0]  %s1754, 1024, %s7, [#allocation3], 256, 256, 16
    $region33: #{tpu_custom_call.1} parent=1 // pred_fallthru
      _
    // Predicated region
    $region34: #{tpu_custom_call.1} parent=1 // pred_check
      _
    $region35: #{tpu_custom_call.1} parent=1 // pred_check_branch
      %1761 = sbr.rel (0) target = $region37
    $region36: #{tpu_custom_call.1} parent=1 // pred_region
      %1762 = dma.done [#allocation3], 1024
    $region37: #{tpu_custom_call.1} parent=1 // pred_fallthru
      _
    %1763 = vsyncpa [#allocation3], 1

</llo_original>
